<compile_context>
chip_gen: v7x
topology: tpu7x:2x2x1
jax: 0.10.0
libtpu: 0.0.40
codegen_flags: <defaults>
</compile_context>

<pallas_src>
import functools

import numpy as np
import jax
import jax.numpy as jnp
from jax.experimental import pallas as pl
from jax.experimental.pallas import tpu as pltpu

WIN_SIZE = 11
WIN_SIGMA = 1.5
DATA_RANGE = 10.0
K1, K2 = 0.01, 0.03
C1 = (K1 * DATA_RANGE) ** 2  # 0.01
C2 = (K2 * DATA_RANGE) ** 2  # 0.09


def _gauss_win(size=WIN_SIZE, sigma=WIN_SIGMA):
    # Same as pytorch_msssim._fspecial_gauss_1d
    coords = np.arange(size, dtype=np.float64) - size // 2
    g = np.exp(-(coords ** 2) / (2.0 * sigma ** 2))
    g = g / g.sum()
    return g.astype(np.float32)


def _conv_matrix(n_in, win):
    """Matrix G (n_out, n_in) such that G @ v == valid 1D conv of v with win."""
    k = win.shape[0]
    n_out = n_in - k + 1
    G = np.zeros((n_out, n_in), dtype=np.float32)
    for i in range(n_out):
        G[i, i:i + k] = win
    return G


def _block_diag(block, reps):
    r, c = block.shape
    out = np.zeros((reps * r, reps * c), dtype=block.dtype)
    for i in range(reps):
        out[i * r:(i + 1) * r, i * c:(i + 1) * c] = block
    return out


def _choose_packing(n, H, W):
    """Pick (lane-pack LP, sublane-stack TG) for n slabs of (H, W)."""
    # Lane pack: put LP slabs side by side along lanes so the last dim >= 128.
    lp = max(1, pl.cdiv(128, W))
    lp = min(lp, max(n, 1))
    # Prefer >= 2 grid steps (v7x has 2 TensorCores) as long as lanes stay >= 64.
    while lp > 1 and pl.cdiv(n, lp) < 2 and (lp // 2) * W >= 64:
        lp //= 2
    g = pl.cdiv(n, lp)
    # Sublane stack: TG groups per grid step -> H-filter matmul M-dim ~256,
    # capped so one data block stays <= ~2 MiB of VMEM.
    tg = max(1, 256 // H)
    blk_cap = max(1, (2 << 20) // max(1, H * lp * W * 4))
    tg = max(1, min(tg, g, blk_cap))
    if g >= 2 and pl.cdiv(g, tg) < 2:
        tg = max(1, g // 2)          # keep >= 2 grid steps when possible
    if (tg * H) % 8 != 0:
        tg = g                       # full-array block dodges the (8,·) rule
    return lp, tg


def _ssim_grad_kernel(x_ref, y_ref, gh_ref, ght_ref, gwt_ref, gw_ref, o_ref,
                      *, inv_n):
    # x_ref/y_ref/o_ref: (TG*H, LP*W) tile — TG lane-packed groups stacked on
    # sublanes, LP slabs packed along lanes.
    # gh:  (TG*Hp, TG*H)  block-diag H-direction gaussian (valid conv)
    # ght: (TG*H, TG*Hp)  its transpose (adjoint / scatter)
    # gwt: (LP*W, LP*Wp)  block-diag W-direction gaussian, applied from right
    # gw:  (LP*Wp, LP*W)  its transpose
    x = x_ref[...].astype(jnp.float32)
    y = y_ref[...].astype(jnp.float32)
    gh = gh_ref[...]
    ght = ght_ref[...]
    gwt = gwt_ref[...]
    gw = gw_ref[...]

    def filt(z):  # valid separable gaussian filter (batched over groups/slabs)
        t = jnp.dot(gh, z, preferred_element_type=jnp.float32)
        return jnp.dot(t, gwt, preferred_element_type=jnp.float32)

    def adj(z):   # adjoint of filt (scatter back)
        t = jnp.dot(ght, z, preferred_element_type=jnp.float32)
        return jnp.dot(t, gw, preferred_element_type=jnp.float32)

    mu1 = filt(x)
    mu2 = filt(y)
    s11 = filt(x * x) - mu1 * mu1
    s22 = filt(y * y) - mu2 * mu2
    s12 = filt(x * y) - mu1 * mu2

    a1 = 2.0 * mu1 * mu2 + C1
    a2 = 2.0 * s12 + C2
    b1 = mu1 * mu1 + mu2 * mu2 + C1
    b2 = s11 + s22 + C2

    # EUP approximate reciprocals instead of VALU divides.
    inv_b1 = pl.reciprocal(b1, approx=True)
    inv_b2 = pl.reciprocal(b2, approx=True)
    inv_b1b2 = inv_b1 * inv_b2

    # partials of ssim_map w.r.t. mu1, sigma11, sigma12
    d_mu1 = 2.0 * mu2 * a2 * inv_b1b2 - 2.0 * mu1 * a1 * a2 * inv_b1b2 * inv_b1
    d_s11 = -a1 * a2 * inv_b1b2 * inv_b2
    d_s12 = 2.0 * a1 * inv_b1b2

    # d ssim_p / d x_q = w_pq * (P_p + x_q * Q_p + y_q * R_p)
    p = d_mu1 - 2.0 * mu1 * d_s11 - mu2 * d_s12
    q = 2.0 * d_s11
    r = d_s12

    grad_ssim = inv_n * (adj(p) + x * adj(q) + y * adj(r))
    # loss = 1 - ssim  ->  grad = -d(ssim)/dx
    o_ref[...] = (-grad_ssim).astype(o_ref.dtype)


def latent_ssim_grads(x, target):
    """grad_x [1 - SSIM(x, target)]  (x, target: NCHW float32)."""
    B, C, H, W = x.shape
    assert target.shape == x.shape
    assert H >= WIN_SIZE and W >= WIN_SIZE

    n = B * C
    Hp, Wp = H - WIN_SIZE + 1, W - WIN_SIZE + 1
    lp, tg = _choose_packing(n, H, W)

    n_pad = pl.cdiv(n, lp * tg) * (lp * tg)   # zero-pad slabs (independent; sliced off)
    G = n_pad // lp
    steps = G // tg

    win = _gauss_win()
    gh = _conv_matrix(H, win)                       # (Hp, H)
    gw = _conv_matrix(W, win)                       # (Wp, W)
    gh_blk = _block_diag(gh, tg)                    # (tg*Hp, tg*H)
    gwt_blk = _block_diag(np.ascontiguousarray(gw.T), lp)   # (lp*W, lp*Wp)
    gh_j = jnp.asarray(gh_blk)
    ght_j = jnp.asarray(np.ascontiguousarray(gh_blk.T))
    gwt_j = jnp.asarray(gwt_blk)
    gw_j = jnp.asarray(np.ascontiguousarray(gwt_blk.T))

    inv_n = 1.0 / float(n * Hp * Wp)                # mean over real B, C, Hp, Wp

    xf = x.reshape(n, H, W)
    yf = target.reshape(n, H, W)
    if n_pad != n:
        pad = jnp.zeros((n_pad - n, H, W), x.dtype)
        xf = jnp.concatenate([xf, pad], axis=0)
        yf = jnp.concatenate([yf, pad], axis=0)

    def pack(a):  # (n_pad, H, W) -> (G*H, lp*W): lp slabs side by side on lanes
        return a.reshape(G, lp, H, W).transpose(0, 2, 1, 3).reshape(G * H, lp * W)

    xp, yp = pack(xf), pack(yf)

    TH, THp = tg * H, tg * Hp
    LW, LWp = lp * W, lp * Wp

    mm_flops = (5 * (2 * THp * TH * LW + 2 * THp * LW * LWp)
                + 3 * (2 * TH * THp * LWp + 2 * TH * LWp * LW))
    cost = pl.CostEstimate(
        flops=int(steps * (mm_flops + 60 * THp * LWp + 10 * TH * LW)),
        transcendentals=int(steps * 2 * THp * LWp),
        bytes_accessed=int(3 * n_pad * H * W * 4
                           + (2 * THp * TH + 2 * LW * LWp) * 4),
    )

    blk_bytes = TH * LW * 4
    filt_bytes = 2 * (THp * TH + LW * LWp) * 4
    vmem_est = 2 * (3 * blk_bytes + filt_bytes) + 24 * THp * LWp * 4 + (8 << 20)
    # Raise v5e's 16 MiB scoped default; keep <= 48 MiB (v7x has 64 MiB physical).
    vmem_limit = int(min(max(vmem_est, 32 << 20), 48 << 20))

    kernel = functools.partial(_ssim_grad_kernel, inv_n=inv_n)
    out = pl.pallas_call(
        kernel,
        out_shape=jax.ShapeDtypeStruct((G * H, LW), x.dtype),
        grid_spec=pltpu.PrefetchScalarGridSpec(
            num_scalar_prefetch=0,
            grid=(steps,),
            in_specs=[
                pl.BlockSpec((TH, LW), lambda i: (i, 0)),
                pl.BlockSpec((TH, LW), lambda i: (i, 0)),
                pl.BlockSpec((THp, TH), lambda i: (0, 0)),
                pl.BlockSpec((TH, THp), lambda i: (0, 0)),
                pl.BlockSpec((LW, LWp), lambda i: (0, 0)),
                pl.BlockSpec((LWp, LW), lambda i: (0, 0)),
            ],
            out_specs=pl.BlockSpec((TH, LW), lambda i: (i, 0)),
        ),
        compiler_params=pltpu.CompilerParams(
            dimension_semantics=("parallel",),
            vmem_limit_bytes=vmem_limit),
        cost_estimate=cost,
    )(xp, yp, gh_j, ght_j, gwt_j, gw_j)

    out = out.reshape(G, H, lp, W).transpose(0, 2, 1, 3).reshape(n_pad, H, W)
    return out[:n].reshape(B, C, H, W)


def _ssim_loss_ref(x, target):
    """Pure-JAX reference: 1 - SSIM (pytorch_msssim semantics), for jax.grad."""
    B, C, H, W = x.shape
    win = _gauss_win()
    gh = jnp.asarray(_conv_matrix(H, win))
    gw = jnp.asarray(_conv_matrix(W, win))

    def filt(z):
        return jnp.einsum('ph,bchw,qw->bcpq', gh, z, gw,
                          precision=jax.lax.Precision.HIGHEST)

    mu1, mu2 = filt(x), filt(target)
    s11 = filt(x * x) - mu1 * mu1
    s22 = filt(target * target) - mu2 * mu2
    s12 = filt(x * target) - mu1 * mu2
    cs_map = (2.0 * s12 + C2) / (s11 + s22 + C2)
    ssim_map = ((2.0 * mu1 * mu2 + C1) / (mu1 * mu1 + mu2 * mu2 + C1)) * cs_map
    ssim_per_channel = ssim_map.reshape(B, C, -1).mean(-1)
    return 1.0 - ssim_per_channel.mean()


if __name__ == "__main__":
    key = jax.random.PRNGKey(0)
    kx, kt = jax.random.split(key)
    # channel=4 is fixed by SSIM(channel=4) (latent-space images).
    B, C, H, W = 2, 4, 16, 16
    x = jax.random.normal(kx, (B, C, H, W), dtype=jnp.float32)
    # Deterministic synthetic "target" latent buffer.
    # TODO(synk): the real module builds `target` with a VAE encoder
    # (model.encode_first_stage) in set_targets; that stage is outside this kernel.
    target = jax.random.normal(kt, (B, C, H, W), dtype=jnp.float32)

    grad = latent_ssim_grads(x, target)
    grad = jax.block_until_ready(grad)
    assert grad.shape == x.shape and grad.dtype == x.dtype

    # Sanity-check against autodiff of the pure-JAX SSIM reference.
    ref = jax.grad(_ssim_loss_ref)(x, target)
    rel_err = float(jnp.max(jnp.abs(grad - ref)) /
                    (jnp.max(jnp.abs(ref)) + 1e-12))
    assert rel_err < 2e-2, f"mismatch vs autodiff reference: rel_err={rel_err}"

    print("KERNEL_OK")
</pallas_src>

<mosaic_0001>
module attributes {stable_mosaic.version = 11 : i64} {
  func.func @_ssim_grad_kernel(%arg0: i32, %arg1: memref<16x64xf32, #tpu.memory_space<vmem>>, %arg2: memref<16x64xf32, #tpu.memory_space<vmem>>, %arg3: memref<6x16xf32, #tpu.memory_space<vmem>>, %arg4: memref<16x6xf32, #tpu.memory_space<vmem>>, %arg5: memref<64x24xf32, #tpu.memory_space<vmem>>, %arg6: memref<24x64xf32, #tpu.memory_space<vmem>>, %arg7: memref<16x64xf32, #tpu.memory_space<vmem>>) attributes {dimension_semantics = [#tpu.dimension_semantics<parallel>], iteration_bounds = array<i64: 2>, scalar_prefetch = 0 : i64, scratch_operands = 0 : i64, tpu.core_type = #tpu.core_type<tc>, window_params = [{transform_indices = @transform_0, window_bounds = array<i64: 16, 64>}, {transform_indices = @transform_1, window_bounds = array<i64: 16, 64>}, {pipeline_mode = #tpu.pipeline_mode<synchronous>, transform_indices = @transform_2, window_bounds = array<i64: 6, 16>}, {pipeline_mode = #tpu.pipeline_mode<synchronous>, transform_indices = @transform_3, window_bounds = array<i64: 16, 6>}, {pipeline_mode = #tpu.pipeline_mode<synchronous>, transform_indices = @transform_4, window_bounds = array<i64: 64, 24>}, {pipeline_mode = #tpu.pipeline_mode<synchronous>, transform_indices = @transform_5, window_bounds = array<i64: 24, 64>}, {transform_indices = @transform_6, window_bounds = array<i64: 16, 64>}]} {
    %c0 = arith.constant 0 : index
    %c0_0 = arith.constant 0 : index
    %0 = vector.load %arg1[%c0, %c0_0] : memref<16x64xf32, #tpu.memory_space<vmem>>, vector<16x64xf32>
    %c0_1 = arith.constant 0 : index
    %c0_2 = arith.constant 0 : index
    %1 = vector.load %arg2[%c0_1, %c0_2] : memref<16x64xf32, #tpu.memory_space<vmem>>, vector<16x64xf32>
    %c0_3 = arith.constant 0 : index
    %c0_4 = arith.constant 0 : index
    %2 = vector.load %arg3[%c0_3, %c0_4] : memref<6x16xf32, #tpu.memory_space<vmem>>, vector<6x16xf32>
    %c0_5 = arith.constant 0 : index
    %c0_6 = arith.constant 0 : index
    %3 = vector.load %arg4[%c0_5, %c0_6] : memref<16x6xf32, #tpu.memory_space<vmem>>, vector<16x6xf32>
    %c0_7 = arith.constant 0 : index
    %c0_8 = arith.constant 0 : index
    %4 = vector.load %arg5[%c0_7, %c0_8] : memref<64x24xf32, #tpu.memory_space<vmem>>, vector<64x24xf32>
    %c0_9 = arith.constant 0 : index
    %c0_10 = arith.constant 0 : index
    %5 = vector.load %arg6[%c0_9, %c0_10] : memref<24x64xf32, #tpu.memory_space<vmem>>, vector<24x64xf32>
    %cst = arith.constant dense<0.000000e+00> : vector<6x64xf32>
    %6 = tpu.matmul %2, %0, %cst {dimension_numbers = #tpu.dot_dimension_numbers<[1], [0], [0], [1], [0, 0, 1, 1], [], []>} : vector<6x16xf32>, vector<16x64xf32>, vector<6x64xf32> -> vector<6x64xf32>
    %cst_11 = arith.constant dense<0.000000e+00> : vector<6x24xf32>
    %7 = tpu.matmul %6, %4, %cst_11 {dimension_numbers = #tpu.dot_dimension_numbers<[1], [0], [0], [1], [0, 0, 1, 1], [], []>} : vector<6x64xf32>, vector<64x24xf32>, vector<6x24xf32> -> vector<6x24xf32>
    %cst_12 = arith.constant dense<0.000000e+00> : vector<6x64xf32>
    %8 = tpu.matmul %2, %1, %cst_12 {dimension_numbers = #tpu.dot_dimension_numbers<[1], [0], [0], [1], [0, 0, 1, 1], [], []>} : vector<6x16xf32>, vector<16x64xf32>, vector<6x64xf32> -> vector<6x64xf32>
    %cst_13 = arith.constant dense<0.000000e+00> : vector<6x24xf32>
    %9 = tpu.matmul %8, %4, %cst_13 {dimension_numbers = #tpu.dot_dimension_numbers<[1], [0], [0], [1], [0, 0, 1, 1], [], []>} : vector<6x64xf32>, vector<64x24xf32>, vector<6x24xf32> -> vector<6x24xf32>
    %10 = arith.mulf %0, %0 : vector<16x64xf32>
    %cst_14 = arith.constant dense<0.000000e+00> : vector<6x64xf32>
    %11 = tpu.matmul %2, %10, %cst_14 {dimension_numbers = #tpu.dot_dimension_numbers<[1], [0], [0], [1], [0, 0, 1, 1], [], []>} : vector<6x16xf32>, vector<16x64xf32>, vector<6x64xf32> -> vector<6x64xf32>
    %cst_15 = arith.constant dense<0.000000e+00> : vector<6x24xf32>
    %12 = tpu.matmul %11, %4, %cst_15 {dimension_numbers = #tpu.dot_dimension_numbers<[1], [0], [0], [1], [0, 0, 1, 1], [], []>} : vector<6x64xf32>, vector<64x24xf32>, vector<6x24xf32> -> vector<6x24xf32>
    %13 = arith.mulf %7, %7 : vector<6x24xf32>
    %14 = arith.subf %12, %13 : vector<6x24xf32>
    %15 = arith.mulf %1, %1 : vector<16x64xf32>
    %cst_16 = arith.constant dense<0.000000e+00> : vector<6x64xf32>
    %16 = tpu.matmul %2, %15, %cst_16 {dimension_numbers = #tpu.dot_dimension_numbers<[1], [0], [0], [1], [0, 0, 1, 1], [], []>} : vector<6x16xf32>, vector<16x64xf32>, vector<6x64xf32> -> vector<6x64xf32>
    %cst_17 = arith.constant dense<0.000000e+00> : vector<6x24xf32>
    %17 = tpu.matmul %16, %4, %cst_17 {dimension_numbers = #tpu.dot_dimension_numbers<[1], [0], [0], [1], [0, 0, 1, 1], [], []>} : vector<6x64xf32>, vector<64x24xf32>, vector<6x24xf32> -> vector<6x24xf32>
    %18 = arith.mulf %9, %9 : vector<6x24xf32>
    %19 = arith.subf %17, %18 : vector<6x24xf32>
    %20 = arith.mulf %0, %1 : vector<16x64xf32>
    %cst_18 = arith.constant dense<0.000000e+00> : vector<6x64xf32>
    %21 = tpu.matmul %2, %20, %cst_18 {dimension_numbers = #tpu.dot_dimension_numbers<[1], [0], [0], [1], [0, 0, 1, 1], [], []>} : vector<6x16xf32>, vector<16x64xf32>, vector<6x64xf32> -> vector<6x64xf32>
    %cst_19 = arith.constant dense<0.000000e+00> : vector<6x24xf32>
    %22 = tpu.matmul %21, %4, %cst_19 {dimension_numbers = #tpu.dot_dimension_numbers<[1], [0], [0], [1], [0, 0, 1, 1], [], []>} : vector<6x64xf32>, vector<64x24xf32>, vector<6x24xf32> -> vector<6x24xf32>
    %23 = arith.mulf %7, %9 : vector<6x24xf32>
    %24 = arith.subf %22, %23 : vector<6x24xf32>
    %cst_20 = arith.constant 2.000000e+00 : f32
    %25 = vector.broadcast %cst_20 : f32 to vector<6x24xf32>
    %26 = arith.mulf %25, %7 : vector<6x24xf32>
    %27 = arith.mulf %26, %9 : vector<6x24xf32>
    %cst_21 = arith.constant 0.00999999977 : f32
    %28 = vector.broadcast %cst_21 : f32 to vector<6x24xf32>
    %29 = arith.addf %27, %28 : vector<6x24xf32>
    %cst_22 = arith.constant 2.000000e+00 : f32
    %30 = vector.broadcast %cst_22 : f32 to vector<6x24xf32>
    %31 = arith.mulf %30, %24 : vector<6x24xf32>
    %cst_23 = arith.constant 9.000000e-02 : f32
    %32 = vector.broadcast %cst_23 : f32 to vector<6x24xf32>
    %33 = arith.addf %31, %32 : vector<6x24xf32>
    %34 = arith.mulf %7, %7 : vector<6x24xf32>
    %35 = arith.mulf %9, %9 : vector<6x24xf32>
    %36 = arith.addf %34, %35 : vector<6x24xf32>
    %cst_24 = arith.constant 0.00999999977 : f32
    %37 = vector.broadcast %cst_24 : f32 to vector<6x24xf32>
    %38 = arith.addf %36, %37 : vector<6x24xf32>
    %39 = arith.addf %14, %19 : vector<6x24xf32>
    %cst_25 = arith.constant 9.000000e-02 : f32
    %40 = vector.broadcast %cst_25 : f32 to vector<6x24xf32>
    %41 = arith.addf %39, %40 : vector<6x24xf32>
    %42 = tpu.reciprocal %38 {approx = true} : vector<6x24xf32> -> vector<6x24xf32>
    %43 = tpu.reciprocal %41 {approx = true} : vector<6x24xf32> -> vector<6x24xf32>
    %44 = arith.mulf %42, %43 : vector<6x24xf32>
    %cst_26 = arith.constant 2.000000e+00 : f32
    %45 = vector.broadcast %cst_26 : f32 to vector<6x24xf32>
    %46 = arith.mulf %45, %9 : vector<6x24xf32>
    %47 = arith.mulf %46, %33 : vector<6x24xf32>
    %48 = arith.mulf %47, %44 : vector<6x24xf32>
    %cst_27 = arith.constant 2.000000e+00 : f32
    %49 = vector.broadcast %cst_27 : f32 to vector<6x24xf32>
    %50 = arith.mulf %49, %7 : vector<6x24xf32>
    %51 = arith.mulf %50, %29 : vector<6x24xf32>
    %52 = arith.mulf %51, %33 : vector<6x24xf32>
    %53 = arith.mulf %52, %44 : vector<6x24xf32>
    %54 = arith.mulf %53, %42 : vector<6x24xf32>
    %55 = arith.subf %48, %54 : vector<6x24xf32>
    %cst_28 = arith.constant 0.000000e+00 : f32
    %56 = vector.broadcast %cst_28 : f32 to vector<6x24xf32>
    %57 = arith.subf %56, %29 : vector<6x24xf32>
    %58 = arith.mulf %57, %33 : vector<6x24xf32>
    %59 = arith.mulf %58, %44 : vector<6x24xf32>
    %60 = arith.mulf %59, %43 : vector<6x24xf32>
    %cst_29 = arith.constant 2.000000e+00 : f32
    %61 = vector.broadcast %cst_29 : f32 to vector<6x24xf32>
    %62 = arith.mulf %61, %29 : vector<6x24xf32>
    %63 = arith.mulf %62, %44 : vector<6x24xf32>
    %cst_30 = arith.constant 2.000000e+00 : f32
    %64 = vector.broadcast %cst_30 : f32 to vector<6x24xf32>
    %65 = arith.mulf %64, %7 : vector<6x24xf32>
    %66 = arith.mulf %65, %60 : vector<6x24xf32>
    %67 = arith.subf %55, %66 : vector<6x24xf32>
    %68 = arith.mulf %9, %63 : vector<6x24xf32>
    %69 = arith.subf %67, %68 : vector<6x24xf32>
    %cst_31 = arith.constant 2.000000e+00 : f32
    %70 = vector.broadcast %cst_31 : f32 to vector<6x24xf32>
    %71 = arith.mulf %70, %60 : vector<6x24xf32>
    %cst_32 = arith.constant dense<0.000000e+00> : vector<16x24xf32>
    %72 = tpu.matmul %3, %69, %cst_32 {dimension_numbers = #tpu.dot_dimension_numbers<[1], [0], [0], [1], [0, 0, 1, 1], [], []>} : vector<16x6xf32>, vector<6x24xf32>, vector<16x24xf32> -> vector<16x24xf32>
    %cst_33 = arith.constant dense<0.000000e+00> : vector<16x64xf32>
    %73 = tpu.matmul %72, %5, %cst_33 {dimension_numbers = #tpu.dot_dimension_numbers<[1], [0], [0], [1], [0, 0, 1, 1], [], []>} : vector<16x24xf32>, vector<24x64xf32>, vector<16x64xf32> -> vector<16x64xf32>
    %cst_34 = arith.constant dense<0.000000e+00> : vector<16x24xf32>
    %74 = tpu.matmul %3, %71, %cst_34 {dimension_numbers = #tpu.dot_dimension_numbers<[1], [0], [0], [1], [0, 0, 1, 1], [], []>} : vector<16x6xf32>, vector<6x24xf32>, vector<16x24xf32> -> vector<16x24xf32>
    %cst_35 = arith.constant dense<0.000000e+00> : vector<16x64xf32>
    %75 = tpu.matmul %74, %5, %cst_35 {dimension_numbers = #tpu.dot_dimension_numbers<[1], [0], [0], [1], [0, 0, 1, 1], [], []>} : vector<16x24xf32>, vector<24x64xf32>, vector<16x64xf32> -> vector<16x64xf32>
    %76 = arith.mulf %0, %75 : vector<16x64xf32>
    %77 = arith.addf %73, %76 : vector<16x64xf32>
    %cst_36 = arith.constant dense<0.000000e+00> : vector<16x24xf32>
    %78 = tpu.matmul %3, %63, %cst_36 {dimension_numbers = #tpu.dot_dimension_numbers<[1], [0], [0], [1], [0, 0, 1, 1], [], []>} : vector<16x6xf32>, vector<6x24xf32>, vector<16x24xf32> -> vector<16x24xf32>
    %cst_37 = arith.constant dense<0.000000e+00> : vector<16x64xf32>
    %79 = tpu.matmul %78, %5, %cst_37 {dimension_numbers = #tpu.dot_dimension_numbers<[1], [0], [0], [1], [0, 0, 1, 1], [], []>} : vector<16x24xf32>, vector<24x64xf32>, vector<16x64xf32> -> vector<16x64xf32>
    %80 = arith.mulf %1, %79 : vector<16x64xf32>
    %81 = arith.addf %77, %80 : vector<16x64xf32>
    %cst_38 = arith.constant 0.00347222225 : f32
    %82 = vector.broadcast %cst_38 : f32 to vector<16x64xf32>
    %83 = arith.mulf %82, %81 : vector<16x64xf32>
    %cst_39 = arith.constant 0.000000e+00 : f32
    %84 = vector.broadcast %cst_39 : f32 to vector<16x64xf32>
    %85 = arith.subf %84, %83 : vector<16x64xf32>
    %c0_40 = arith.constant 0 : index
    %c0_41 = arith.constant 0 : index
    %86 = vector.load %arg7[%c0_40, %c0_41] : memref<16x64xf32, #tpu.memory_space<vmem>>, vector<16x64xf32>
    tpu.vector_store %arg7[%c0_40, %c0_41], %85 {strides = array<i32>} : memref<16x64xf32, #tpu.memory_space<vmem>>, vector<16x64xf32>,
    return
  }
  func.func @transform_0(%arg0: i32) -> (i32, i32) {
    %c0_i32 = arith.constant 0 : i32
    %c0_i32_0 = arith.constant 0 : i32
    return %arg0, %c0_i32 : i32, i32
  }
  func.func @transform_1(%arg0: i32) -> (i32, i32) {
    %c0_i32 = arith.constant 0 : i32
    %c0_i32_0 = arith.constant 0 : i32
    return %arg0, %c0_i32 : i32, i32
  }
  func.func @transform_2(%arg0: i32) -> (i32, i32) {
    %c0_i32 = arith.constant 0 : i32
    %c0_i32_0 = arith.constant 0 : i32
    %c0_i32_1 = arith.constant 0 : i32
    return %c0_i32, %c0_i32_0 : i32, i32
  }
  func.func @transform_3(%arg0: i32) -> (i32, i32) {
    %c0_i32 = arith.constant 0 : i32
    %c0_i32_0 = arith.constant 0 : i32
    %c0_i32_1 = arith.constant 0 : i32
    return %c0_i32, %c0_i32_0 : i32, i32
  }
  func.func @transform_4(%arg0: i32) -> (i32, i32) {
    %c0_i32 = arith.constant 0 : i32
    %c0_i32_0 = arith.constant 0 : i32
    %c0_i32_1 = arith.constant 0 : i32
    return %c0_i32, %c0_i32_0 : i32, i32
  }
  func.func @transform_5(%arg0: i32) -> (i32, i32) {
    %c0_i32 = arith.constant 0 : i32
    %c0_i32_0 = arith.constant 0 : i32
    %c0_i32_1 = arith.constant 0 : i32
    return %c0_i32, %c0_i32_0 : i32, i32
  }
  func.func @transform_6(%arg0: i32) -> (i32, i32) {
    %c0_i32 = arith.constant 0 : i32
    %c0_i32_0 = arith.constant 0 : i32
    return %arg0, %c0_i32 : i32, i32
  }
}

</mosaic_0001>

<llo_original>
// kernel: tpu_custom_call.1
$region0: #{tpu_custom_call.1}
  #allocation0 [shape = 'u32[]', space=smem, size = 0x4, offset = 0x4, fixed_abs, tag = 'smem constant byte address 0x4 - core index']
  #allocation1 [shape = 'u32[144,128]{1,0:T(1,128)}', space=vmem, size = 0x12000, scoped, tag = 'internal scratch']
  %s0 = inlined_call_operand.vmem [shape: f32[32,64], index: 0, kind: input, shape index: {}]
  %s1 = inlined_call_operand.vmem [shape: f32[32,64], index: 1, kind: input, shape index: {}]
  %s2 = inlined_call_operand.vmem [shape: f32[6,16], index: 2, kind: input, shape index: {}]
  %s3 = inlined_call_operand.vmem [shape: f32[16,6], index: 3, kind: input, shape index: {}]
  %s4 = inlined_call_operand.vmem [shape: f32[64,24], index: 4, kind: input, shape index: {}]
  %s5 = inlined_call_operand.vmem [shape: f32[24,64], index: 5, kind: input, shape index: {}]
  %s6 = inlined_call_operand.hbm [shape: f32[32,64], index: 6, kind: output, shape index: {}]
  %s7 = sld [smem:[#allocation0]]
  $region57: #{tpu_custom_call.1} parent=0
    _
  %s9 = ssub.s32 1, %s7
  %s10 = scalar_select 0, %s9, %s7
  $region1: #{tpu_custom_call.1} parent=0
    #allocation2 [shape = 'u8[16384]{0}', space=vmem, size = 0x4000, scoped, tag = 'output window, operand 0']
    #allocation3 [shape = 's32[2]{0}', space=sflag, size = 0x8, scoped, tag = 'scoped memory for tpu_custom_call.1']
    %11 = vsyncpa [#allocation3], 0
    %s12 = scalar_lea.sflag [#allocation3], 1
    %13 = vsyncpa %s12, 0
    loop: start=0, step=1, limit=4
    $region2: #{tpu_custom_call.1} parent=1 // loop_pre_header
      _
    $region3: #{tpu_custom_call.1} parent=1 // loop_header
      %s15 = sphi 0, %s19
      %p16 = scmp.ge.s32.totalorder %s15, 4
      %s25 = sphi 0, %s27
      %s28 = sphi 0, %s25
      %s29 = sphi 0, %s28
      %s45 = sphi 0, %s29
      %s51 = sphi 0, %s53
      %s54 = sphi 0, %s51
      %s55 = sphi 0, %s54
      %s71 = sphi 0, %s55
      %s75 = sphi 0, %s75
      %s77 = sphi 0, %s75
      %s78 = sphi 0, %s77
      %s92 = sphi 0, %s78
      %s96 = sphi 0, %s96
      %s98 = sphi 0, %s96
      %s99 = sphi 0, %s98
      %s113 = sphi 0, %s99
      %s117 = sphi 0, %s117
      %s119 = sphi 0, %s117
      %s120 = sphi 0, %s119
      %s134 = sphi 0, %s120
      %s138 = sphi 0, %s138
      %s140 = sphi 0, %s138
      %s141 = sphi 0, %s140
      %s155 = sphi 0, %s141
      %s161 = sphi 0, %s163
      %s164 = sphi 0, %s161
      %s165 = sphi 0, %s164
      %s181 = sphi 0, %s165
    $region4: #{tpu_custom_call.1} parent=1 // loop_header_branch
      %18 = sbr.rel (%p16) target = $region8
    $region5: #{tpu_custom_call.1} parent=1 // loop_body
      %s20 = ssub.s32 %s15, 1
      %s21 = ssub.s32 %s15, 2
      %s22 = sadd.s32 %s15, 1
      %s23 = ssub.s32 %s15, %s22
      %p24 = scmp.eq.s32.totalorder %s23, 0
      %s26 = sadd.s32 %s25, 1
      %s27 = scalar_select %p24, %s25, %s26
      %p30 = pneg %p24
      %p31 = scmp.eq.s32.totalorder %s15, 1
      %p32 = por %p30, %p31
      %p33 = scmp.ne.s32.totalorder %s25, %s28
      %p34 = scmp.eq.s32.totalorder %s15, 0
      %p35 = por %p33, %p34
      %p36 = scmp.ne.s32.totalorder %s25, %s28
      %p37 = scmp.eq.s32.totalorder %s20, 1
      %p38 = por %p36, %p37
      %p39 = scmp.ne.s32.totalorder %s28, %s29
      %p40 = scmp.eq.s32.totalorder %s20, 0
      %p41 = por %p39, %p40
      %p42 = scmp.ne.s32.totalorder %s28, %s29
      %p43 = scmp.eq.s32.totalorder %s21, 1
      %p44 = por %p42, %p43
      %p46 = scmp.ne.s32.totalorder %s29, %s45
      %p47 = scmp.eq.s32.totalorder %s21, 0
      %p48 = por %p46, %p47
      %s49 = ssub.s32 %s15, %s22
      %p50 = scmp.eq.s32.totalorder %s49, 0
      %s52 = sadd.s32 %s51, 1
      %s53 = scalar_select %p50, %s51, %s52
      %p56 = pneg %p50
      %p57 = scmp.eq.s32.totalorder %s15, 1
      %p58 = por %p56, %p57
      %p59 = scmp.ne.s32.totalorder %s51, %s54
      %p60 = scmp.eq.s32.totalorder %s15, 0
      %p61 = por %p59, %p60
      %p62 = scmp.ne.s32.totalorder %s51, %s54
      %p63 = scmp.eq.s32.totalorder %s20, 1
      %p64 = por %p62, %p63
      %p65 = scmp.ne.s32.totalorder %s54, %s55
      %p66 = scmp.eq.s32.totalorder %s20, 0
      %p67 = por %p65, %p66
      %p68 = scmp.ne.s32.totalorder %s54, %s55
      %p69 = scmp.eq.s32.totalorder %s21, 1
      %p70 = por %p68, %p69
      %p72 = scmp.ne.s32.totalorder %s55, %s71
      %p73 = scmp.eq.s32.totalorder %s21, 0
      %p74 = por %p72, %p73
      %s76 = sadd.s32 %s75, 1
      %p79 = scmp.eq.s32.totalorder %s15, 1
      %p80 = scmp.ne.s32.totalorder %s75, %s77
      %p81 = scmp.eq.s32.totalorder %s15, 0
      %p82 = por %p80, %p81
      %p83 = scmp.ne.s32.totalorder %s75, %s77
      %p84 = scmp.eq.s32.totalorder %s20, 1
      %p85 = por %p83, %p84
      %p86 = scmp.ne.s32.totalorder %s77, %s78
      %p87 = scmp.eq.s32.totalorder %s20, 0
      %p88 = por %p86, %p87
      %p89 = scmp.ne.s32.totalorder %s77, %s78
      %p90 = scmp.eq.s32.totalorder %s21, 1
      %p91 = por %p89, %p90
      %p93 = scmp.ne.s32.totalorder %s78, %s92
      %p94 = scmp.eq.s32.totalorder %s21, 0
      %p95 = por %p93, %p94
      %s97 = sadd.s32 %s96, 1
      %p100 = scmp.eq.s32.totalorder %s15, 1
      %p101 = scmp.ne.s32.totalorder %s96, %s98
      %p102 = scmp.eq.s32.totalorder %s15, 0
      %p103 = por %p101, %p102
      %p104 = scmp.ne.s32.totalorder %s96, %s98
      %p105 = scmp.eq.s32.totalorder %s20, 1
      %p106 = por %p104, %p105
      %p107 = scmp.ne.s32.totalorder %s98, %s99
      %p108 = scmp.eq.s32.totalorder %s20, 0
      %p109 = por %p107, %p108
      %p110 = scmp.ne.s32.totalorder %s98, %s99
      %p111 = scmp.eq.s32.totalorder %s21, 1
      %p112 = por %p110, %p111
      %p114 = scmp.ne.s32.totalorder %s99, %s113
      %p115 = scmp.eq.s32.totalorder %s21, 0
      %p116 = por %p114, %p115
      %s118 = sadd.s32 %s117, 1
      %p121 = scmp.eq.s32.totalorder %s15, 1
      %p122 = scmp.ne.s32.totalorder %s117, %s119
      %p123 = scmp.eq.s32.totalorder %s15, 0
      %p124 = por %p122, %p123
      %p125 = scmp.ne.s32.totalorder %s117, %s119
      %p126 = scmp.eq.s32.totalorder %s20, 1
      %p127 = por %p125, %p126
      %p128 = scmp.ne.s32.totalorder %s119, %s120
      %p129 = scmp.eq.s32.totalorder %s20, 0
      %p130 = por %p128, %p129
      %p131 = scmp.ne.s32.totalorder %s119, %s120
      %p132 = scmp.eq.s32.totalorder %s21, 1
      %p133 = por %p131, %p132
      %p135 = scmp.ne.s32.totalorder %s120, %s134
      %p136 = scmp.eq.s32.totalorder %s21, 0
      %p137 = por %p135, %p136
      %s139 = sadd.s32 %s138, 1
      %p142 = scmp.eq.s32.totalorder %s15, 1
      %p143 = scmp.ne.s32.totalorder %s138, %s140
      %p144 = scmp.eq.s32.totalorder %s15, 0
      %p145 = por %p143, %p144
      %p146 = scmp.ne.s32.totalorder %s138, %s140
      %p147 = scmp.eq.s32.totalorder %s20, 1
      %p148 = por %p146, %p147
      %p149 = scmp.ne.s32.totalorder %s140, %s141
      %p150 = scmp.eq.s32.totalorder %s20, 0
      %p151 = por %p149, %p150
      %p152 = scmp.ne.s32.totalorder %s140, %s141
      %p153 = scmp.eq.s32.totalorder %s21, 1
      %p154 = por %p152, %p153
      %p156 = scmp.ne.s32.totalorder %s141, %s155
      %p157 = scmp.eq.s32.totalorder %s21, 0
      %p158 = por %p156, %p157
      %s159 = ssub.s32 %s15, %s22
      %p160 = scmp.eq.s32.totalorder %s159, 0
      %s162 = sadd.s32 %s161, 1
      %s163 = scalar_select %p160, %s161, %s162
      %p166 = pneg %p160
      %p167 = scmp.eq.s32.totalorder %s15, 1
      %p168 = por %p166, %p167
      %p169 = scmp.ne.s32.totalorder %s161, %s164
      %p170 = scmp.eq.s32.totalorder %s15, 0
      %p171 = por %p169, %p170
      %p172 = scmp.ne.s32.totalorder %s161, %s164
      %p173 = scmp.eq.s32.totalorder %s20, 1
      %p174 = por %p172, %p173
      %p175 = scmp.ne.s32.totalorder %s164, %s165
      %p176 = scmp.eq.s32.totalorder %s20, 0
      %p177 = por %p175, %p176
      %p178 = scmp.ne.s32.totalorder %s164, %s165
      %p179 = scmp.eq.s32.totalorder %s21, 1
      %p180 = por %p178, %p179
      %p182 = scmp.ne.s32.totalorder %s165, %s181
      %p183 = scmp.eq.s32.totalorder %s21, 0
      %p184 = por %p182, %p183
      %p185 = scmp.le.s32.totalorder 1, %s15
      %p186 = scmp.lt.s32.totalorder %s15, 3
      %p187 = pnand %p185, %p186
      %p188 = pneg %p187
      // Predicated region
      $region9: #{tpu_custom_call.1} parent=5 // pred_check
        _
      $region10: #{tpu_custom_call.1} parent=5 // pred_check_branch
        %190 = sbr.rel (%p187) target = $region12
      $region11: #{tpu_custom_call.1} parent=5 // pred_region
        %s191 = ssub.s32 %s15, 1
        // Predicated region
        $region13: #{tpu_custom_call.1} parent=11 // pred_check
          %p192 = pneg %p88
        $region14: #{tpu_custom_call.1} parent=11 // pred_check_branch
          %194 = sbr.rel (%p192) target = $region16
        $region15: #{tpu_custom_call.1} parent=11 // pred_region
          _
        $region16: #{tpu_custom_call.1} parent=11 // pred_fallthru
          _
        // Predicated region
        $region17: #{tpu_custom_call.1} parent=11 // pred_check
          %p195 = pneg %p109
        $region18: #{tpu_custom_call.1} parent=11 // pred_check_branch
          %197 = sbr.rel (%p195) target = $region20
        $region19: #{tpu_custom_call.1} parent=11 // pred_region
          _
        $region20: #{tpu_custom_call.1} parent=11 // pred_fallthru
          _
        // Predicated region
        $region21: #{tpu_custom_call.1} parent=11 // pred_check
          %p198 = pneg %p130
        $region22: #{tpu_custom_call.1} parent=11 // pred_check_branch
          %200 = sbr.rel (%p198) target = $region24
        $region23: #{tpu_custom_call.1} parent=11 // pred_region
          _
        $region24: #{tpu_custom_call.1} parent=11 // pred_fallthru
          _
        // Predicated region
        $region25: #{tpu_custom_call.1} parent=11 // pred_check
          %p201 = pneg %p151
        $region26: #{tpu_custom_call.1} parent=11 // pred_check_branch
          %203 = sbr.rel (%p201) target = $region28
        $region27: #{tpu_custom_call.1} parent=11 // pred_region
          _
        $region28: #{tpu_custom_call.1} parent=11 // pred_fallthru
          _
      $region12: #{tpu_custom_call.1} parent=5 // pred_fallthru
        _
      %p204 = scmp.lt.s32.totalorder %s15, 2
      // Predicated region
      $region29: #{tpu_custom_call.1} parent=5 // pred_check
        %p205 = pneg %p204
      $region30: #{tpu_custom_call.1} parent=5 // pred_check_branch
        %207 = sbr.rel (%p205) target = $region32
      $region31: #{tpu_custom_call.1} parent=5 // pred_region
        // Predicated region
        $region33: #{tpu_custom_call.1} parent=31 // pred_check
          %p208 = pneg %p35
        $region34: #{tpu_custom_call.1} parent=31 // pred_check_branch
          %210 = sbr.rel (%p208) target = $region36
        $region35: #{tpu_custom_call.1} parent=31 // pred_region
          %s211 = smul.u32 2, %s15
          %p212 = scmp.lt.s32.totalorder %s211, 3
          %s213 = scalar_select %p212, %s211, 3
          %s214 = smul.addr %s213, 8
          %s215 = scalar_lea.vmem %s0, %s214
          %s216 = smul.u32 2, %s15
        $region36: #{tpu_custom_call.1} parent=31 // pred_fallthru
          _
        // Predicated region
        $region37: #{tpu_custom_call.1} parent=31 // pred_check
          %p217 = pneg %p61
        $region38: #{tpu_custom_call.1} parent=31 // pred_check_branch
          %219 = sbr.rel (%p217) target = $region40
        $region39: #{tpu_custom_call.1} parent=31 // pred_region
          %s220 = smul.u32 2, %s15
          %p221 = scmp.lt.s32.totalorder %s220, 3
          %s222 = scalar_select %p221, %s220, 3
          %s223 = smul.addr %s222, 8
          %s224 = scalar_lea.vmem %s1, %s223
          %s225 = smul.u32 2, %s15
        $region40: #{tpu_custom_call.1} parent=31 // pred_fallthru
          _
      $region32: #{tpu_custom_call.1} parent=5 // pred_fallthru
        _
      %p226 = scmp.le.s32.totalorder 1, %s15
      %p227 = scmp.lt.s32.totalorder %s15, 3
      %p228 = pnand %p226, %p227
      %p229 = pneg %p228
      // Predicated region
      $region41: #{tpu_custom_call.1} parent=5 // pred_check
        _
      $region42: #{tpu_custom_call.1} parent=5 // pred_check_branch
        %231 = sbr.rel (%p228) target = $region44
      $region43: #{tpu_custom_call.1} parent=5 // pred_region
        %s232 = ssub.s32 %s15, 1
        %s233 = smul.u32 2, %s20
        %p234 = scmp.lt.s32.totalorder %s233, 3
        %s235 = scalar_select %p234, %s233, 3
        %s236 = smul.addr %s235, 8
        %s237 = scalar_lea.vmem %s0, %s236
        %p238 = pneg %p41
        %p239 = pneg %p38
        %s240 = smul.u32 2, %s20
        %p241 = scmp.lt.s32.totalorder %s240, 3
        %s242 = scalar_select %p241, %s240, 3
        %s243 = smul.addr %s242, 8
        %s244 = scalar_lea.vmem %s1, %s243
        %p245 = pneg %p67
        %p246 = pneg %p64
        %p247 = pneg %p88
        %p248 = pneg %p85
        %p249 = pneg %p109
        %p250 = pneg %p106
        %p251 = pneg %p130
        %p252 = pneg %p127
        %p253 = pneg %p151
        %p254 = pneg %p148
        %p255 = pneg %p177
        %p256 = pneg %p174
        %s257 = sand.u32 %s164, 1
        %s258 = scalar_lea.sflag [#allocation3], %s257
        %s259 = sand.u32 %s164, 1
        %s260 = smul.addr %s259, 16
        %s261 = scalar_lea.vmem [#allocation2], %s260
        %s262 = smul.u32 2, %s20
        %p263 = scmp.lt.s32.totalorder %s262, 3
        %s264 = scalar_select %p263, %s262, 3
        %s265 = smul.addr %s264, 8
        %s266 = scalar_lea.vmem %s0, %s265
        %s267 = smul.u32 2, %s20
        %s268 = smul.u32 2, %s20
        %p269 = scmp.lt.s32.totalorder %s268, 3
        %s270 = scalar_select %p269, %s268, 3
        %s271 = smul.addr %s270, 8
        %s272 = scalar_lea.vmem %s1, %s271
        %s273 = smul.u32 2, %s20
        %s274 = smul.u32 2, %s20
        %v275 = vld [vmem:[%s266] sm:$0xff]
        %v276 = vld [vmem:[%s266 + $0x8] sm:$0xff]
        %v277 = vld [vmem:[%s272] sm:$0xff]
        %v278 = vld [vmem:[%s272 + $0x8] sm:$0xff]
        %v279 = vld [vmem:[%s2] sm:$0x3f]
        %v280 = vld [vmem:[%s3] sm:$0xff]
        %v281 = vld [vmem:[%s3 + $0x8] sm:$0xff]
        %v282 = vld [vmem:[%s4] sm:$0xff]
        %v283 = vld [vmem:[%s4 + $0x8] sm:$0xff]
        %v284 = vld [vmem:[%s4 + $0x10] sm:$0xff]
        %v285 = vld [vmem:[%s4 + $0x18] sm:$0xff]
        %v286 = vld [vmem:[%s4 + $0x20] sm:$0xff]
        %v287 = vld [vmem:[%s4 + $0x28] sm:$0xff]
        %v288 = vld [vmem:[%s4 + $0x30] sm:$0xff]
        %v289 = vld [vmem:[%s4 + $0x38] sm:$0xff]
        %v290 = vld [vmem:[%s5] sm:$0xff]
        %v291 = vld [vmem:[%s5 + $0x8] sm:$0xff]
        %v292 = vld [vmem:[%s5 + $0x10] sm:$0xff]
        %vm293 = vcmask 130048
        %v295 = vsel %vm293, %v279, 0
        %297 = vmatprep.subr.mxu0 0.0
        %298 = vmatpush1.msra.mxu0 %v275
        %299 = vmatprep.subr.mxu0 0.0
        %300 = vmatpush1.msra.mxu0 %v276
        %301 = vmatprep.subr.mxu0 0.0
        %302 = vmatpush1.msra.mxu0 0.0
        %303 = vmatprep.subr.mxu0 0.0
        %304 = vmatpush1.msra.mxu0 0.0
        %305 = vmatprep.subr.mxu0 0.0
        %306 = vmatpush1.msra.mxu0 0.0
        %307 = vmatprep.subr.mxu0 0.0
        %308 = vmatpush1.msra.mxu0 0.0
        %309 = vmatprep.subr.mxu0 0.0
        %310 = vmatpush1.msra.mxu0 0.0
        %311 = vmatprep.subr.mxu0 0.0
        %312 = vmatpush1.msra.mxu0 0.0
        %313 = vmatprep.subr.mxu0 0.0
        %314 = vmatpush1.msra.mxu0 0.0
        %315 = vmatprep.subr.mxu0 0.0
        %316 = vmatpush1.msra.mxu0 0.0
        %317 = vmatprep.subr.mxu0 0.0
        %318 = vmatpush1.msra.mxu0 0.0
        %319 = vmatprep.subr.mxu0 0.0
        %320 = vmatpush1.msra.mxu0 0.0
        %321 = vmatprep.subr.mxu0 0.0
        %322 = vmatpush1.msra.mxu0 0.0
        %323 = vmatprep.subr.mxu0 0.0
        %324 = vmatpush1.msra.mxu0 0.0
        %325 = vmatprep.subr.mxu0 0.0
        %326 = vmatpush1.msra.mxu0 0.0
        %327 = vmatprep.subr.mxu0 0.0
        %328 = vmatpush1.msra.mxu0 0.0
        %329 = vmatprep.subr.mxu0 0.0
        %330 = vmatpush1.msra.mxu0 0.0
        %331 = vmatprep.subr.mxu0 0.0
        %332 = vmatpush1.msra.mxu0 0.0
        %333 = vmatprep.subr.mxu0 0.0
        %334 = vmatpush1.msra.mxu0 0.0
        %335 = vmatprep.subr.mxu0 0.0
        %336 = vmatpush1.msra.mxu0 0.0
        %337 = vmatprep.subr.mxu0 0.0
        %338 = vmatpush1.msra.mxu0 0.0
        %339 = vmatprep.subr.mxu0 0.0
        %340 = vmatpush1.msra.mxu0 0.0
        %341 = vmatprep.subr.mxu0 0.0
        %342 = vmatpush1.msra.mxu0 0.0
        %343 = vmatprep.subr.mxu0 0.0
        %344 = vmatpush1.msra.mxu0 0.0
        %345 = vmatprep.subr.mxu0 0.0
        %346 = vmatpush1.msra.mxu0 0.0
        %347 = vmatprep.subr.mxu0 0.0
        %348 = vmatpush1.msra.mxu0 0.0
        %349 = vmatprep.subr.mxu0 0.0
        %350 = vmatpush1.msra.mxu0 0.0
        %351 = vmatprep.subr.mxu0 0.0
        %352 = vmatpush1.msra.mxu0 0.0
        %353 = vmatprep.subr.mxu0 0.0
        %354 = vmatpush1.msra.mxu0 0.0
        %355 = vmatprep.subr.mxu0 0.0
        %356 = vmatpush1.msra.mxu0 0.0
        %357 = vmatprep.subr.mxu0 0.0
        %358 = vmatpush1.msra.mxu0 0.0
        %359 = vmatprep.subr.mxu0 0.0
        %360 = vmatpush1.msra.mxu0 0.0
        %361 = vmatprep.mubr.f32.mxu0 0.0
        %362 = vmatmul.mubr.f32.gmra.mrb[0].mxu0 %v295
        %v363 = vpop.f32.mrb[0].mxu0
        %v364 = vadd.f32 0.0, %v363
        %v365 = vpop.f32.mrb[0].mxu0
        %366 = vdwg.mxu0
        %vm367 = vcmask 523264
        %v369 = vsel %vm367, %v364, 0
        %371 = vmatprep.subr.mxu0 0.0
        %372 = vmatpush1.msra.mxu0 %v282
        %373 = vmatprep.subr.mxu0 0.0
        %374 = vmatpush1.msra.mxu0 %v283
        %375 = vmatprep.subr.mxu0 0.0
        %376 = vmatpush1.msra.mxu0 %v284
        %377 = vmatprep.subr.mxu0 0.0
        %378 = vmatpush1.msra.mxu0 %v285
        %379 = vmatprep.subr.mxu0 0.0
        %380 = vmatpush1.msra.mxu0 %v286
        %381 = vmatprep.subr.mxu0 0.0
        %382 = vmatpush1.msra.mxu0 %v287
        %383 = vmatprep.subr.mxu0 0.0
        %384 = vmatpush1.msra.mxu0 %v288
        %385 = vmatprep.subr.mxu0 0.0
        %386 = vmatpush1.msra.mxu0 %v289
        %387 = vmatprep.subr.mxu0 0.0
        %388 = vmatpush1.msra.mxu0 0.0
        %389 = vmatprep.subr.mxu0 0.0
        %390 = vmatpush1.msra.mxu0 0.0
        %391 = vmatprep.subr.mxu0 0.0
        %392 = vmatpush1.msra.mxu0 0.0
        %393 = vmatprep.subr.mxu0 0.0
        %394 = vmatpush1.msra.mxu0 0.0
        %395 = vmatprep.subr.mxu0 0.0
        %396 = vmatpush1.msra.mxu0 0.0
        %397 = vmatprep.subr.mxu0 0.0
        %398 = vmatpush1.msra.mxu0 0.0
        %399 = vmatprep.subr.mxu0 0.0
        %400 = vmatpush1.msra.mxu0 0.0
        %401 = vmatprep.subr.mxu0 0.0
        %402 = vmatpush1.msra.mxu0 0.0
        %403 = vmatprep.subr.mxu0 0.0
        %404 = vmatpush1.msra.mxu0 0.0
        %405 = vmatprep.subr.mxu0 0.0
        %406 = vmatpush1.msra.mxu0 0.0
        %407 = vmatprep.subr.mxu0 0.0
        %408 = vmatpush1.msra.mxu0 0.0
        %409 = vmatprep.subr.mxu0 0.0
        %410 = vmatpush1.msra.mxu0 0.0
        %411 = vmatprep.subr.mxu0 0.0
        %412 = vmatpush1.msra.mxu0 0.0
        %413 = vmatprep.subr.mxu0 0.0
        %414 = vmatpush1.msra.mxu0 0.0
        %415 = vmatprep.subr.mxu0 0.0
        %416 = vmatpush1.msra.mxu0 0.0
        %417 = vmatprep.subr.mxu0 0.0
        %418 = vmatpush1.msra.mxu0 0.0
        %419 = vmatprep.subr.mxu0 0.0
        %420 = vmatpush1.msra.mxu0 0.0
        %421 = vmatprep.subr.mxu0 0.0
        %422 = vmatpush1.msra.mxu0 0.0
        %423 = vmatprep.subr.mxu0 0.0
        %424 = vmatpush1.msra.mxu0 0.0
        %425 = vmatprep.subr.mxu0 0.0
        %426 = vmatpush1.msra.mxu0 0.0
        %427 = vmatprep.subr.mxu0 0.0
        %428 = vmatpush1.msra.mxu0 0.0
        %429 = vmatprep.subr.mxu0 0.0
        %430 = vmatpush1.msra.mxu0 0.0
        %431 = vmatprep.subr.mxu0 0.0
        %432 = vmatpush1.msra.mxu0 0.0
        %433 = vmatprep.subr.mxu0 0.0
        %434 = vmatpush1.msra.mxu0 0.0
        %435 = vmatprep.mubr.f32.mxu0 0.0
        %436 = vmatmul.mubr.f32.gmra.mrb[0].mxu0 %v369
        %v437 = vpop.f32.mrb[0].mxu0
        %v438 = vadd.f32 0.0, %v437
        %v439 = vpop.f32.mrb[0].mxu0
        %440 = vdwg.mxu0
        %441 = vmatprep.subr.mxu0 0.0
        %442 = vmatpush1.msra.mxu0 %v277
        %443 = vmatprep.subr.mxu0 0.0
        %444 = vmatpush1.msra.mxu0 %v278
        %445 = vmatprep.subr.mxu0 0.0
        %446 = vmatpush1.msra.mxu0 0.0
        %447 = vmatprep.subr.mxu0 0.0
        %448 = vmatpush1.msra.mxu0 0.0
        %449 = vmatprep.subr.mxu0 0.0
        %450 = vmatpush1.msra.mxu0 0.0
        %451 = vmatprep.subr.mxu0 0.0
        %452 = vmatpush1.msra.mxu0 0.0
        %453 = vmatprep.subr.mxu0 0.0
        %454 = vmatpush1.msra.mxu0 0.0
        %455 = vmatprep.subr.mxu0 0.0
        %456 = vmatpush1.msra.mxu0 0.0
        %457 = vmatprep.subr.mxu0 0.0
        %458 = vmatpush1.msra.mxu0 0.0
        %459 = vmatprep.subr.mxu0 0.0
        %460 = vmatpush1.msra.mxu0 0.0
        %461 = vmatprep.subr.mxu0 0.0
        %462 = vmatpush1.msra.mxu0 0.0
        %463 = vmatprep.subr.mxu0 0.0
        %464 = vmatpush1.msra.mxu0 0.0
        %465 = vmatprep.subr.mxu0 0.0
        %466 = vmatpush1.msra.mxu0 0.0
        %467 = vmatprep.subr.mxu0 0.0
        %468 = vmatpush1.msra.mxu0 0.0
        %469 = vmatprep.subr.mxu0 0.0
        %470 = vmatpush1.msra.mxu0 0.0
        %471 = vmatprep.subr.mxu0 0.0
        %472 = vmatpush1.msra.mxu0 0.0
        %473 = vmatprep.subr.mxu0 0.0
        %474 = vmatpush1.msra.mxu0 0.0
        %475 = vmatprep.subr.mxu0 0.0
        %476 = vmatpush1.msra.mxu0 0.0
        %477 = vmatprep.subr.mxu0 0.0
        %478 = vmatpush1.msra.mxu0 0.0
        %479 = vmatprep.subr.mxu0 0.0
        %480 = vmatpush1.msra.mxu0 0.0
        %481 = vmatprep.subr.mxu0 0.0
        %482 = vmatpush1.msra.mxu0 0.0
        %483 = vmatprep.subr.mxu0 0.0
        %484 = vmatpush1.msra.mxu0 0.0
        %485 = vmatprep.subr.mxu0 0.0
        %486 = vmatpush1.msra.mxu0 0.0
        %487 = vmatprep.subr.mxu0 0.0
        %488 = vmatpush1.msra.mxu0 0.0
        %489 = vmatprep.subr.mxu0 0.0
        %490 = vmatpush1.msra.mxu0 0.0
        %491 = vmatprep.subr.mxu0 0.0
        %492 = vmatpush1.msra.mxu0 0.0
        %493 = vmatprep.subr.mxu0 0.0
        %494 = vmatpush1.msra.mxu0 0.0
        %495 = vmatprep.subr.mxu0 0.0
        %496 = vmatpush1.msra.mxu0 0.0
        %497 = vmatprep.subr.mxu0 0.0
        %498 = vmatpush1.msra.mxu0 0.0
        %499 = vmatprep.subr.mxu0 0.0
        %500 = vmatpush1.msra.mxu0 0.0
        %501 = vmatprep.subr.mxu0 0.0
        %502 = vmatpush1.msra.mxu0 0.0
        %503 = vmatprep.subr.mxu0 0.0
        %504 = vmatpush1.msra.mxu0 0.0
        %505 = vmatprep.mubr.f32.mxu0 0.0
        %506 = vmatmul.mubr.f32.gmra.mrb[0].mxu0 %v295
        %v507 = vpop.f32.mrb[0].mxu0
        %v508 = vadd.f32 0.0, %v507
        %v509 = vpop.f32.mrb[0].mxu0
        %510 = vdwg.mxu0
        %v512 = vsel %vm367, %v508, 0
        %514 = vmatprep.subr.mxu0 0.0
        %515 = vmatpush1.msra.mxu0 %v282
        %516 = vmatprep.subr.mxu0 0.0
        %517 = vmatpush1.msra.mxu0 %v283
        %518 = vmatprep.subr.mxu0 0.0
        %519 = vmatpush1.msra.mxu0 %v284
        %520 = vmatprep.subr.mxu0 0.0
        %521 = vmatpush1.msra.mxu0 %v285
        %522 = vmatprep.subr.mxu0 0.0
        %523 = vmatpush1.msra.mxu0 %v286
        %524 = vmatprep.subr.mxu0 0.0
        %525 = vmatpush1.msra.mxu0 %v287
        %526 = vmatprep.subr.mxu0 0.0
        %527 = vmatpush1.msra.mxu0 %v288
        %528 = vmatprep.subr.mxu0 0.0
        %529 = vmatpush1.msra.mxu0 %v289
        %530 = vmatprep.subr.mxu0 0.0
        %531 = vmatpush1.msra.mxu0 0.0
        %532 = vmatprep.subr.mxu0 0.0
        %533 = vmatpush1.msra.mxu0 0.0
        %534 = vmatprep.subr.mxu0 0.0
        %535 = vmatpush1.msra.mxu0 0.0
        %536 = vmatprep.subr.mxu0 0.0
        %537 = vmatpush1.msra.mxu0 0.0
        %538 = vmatprep.subr.mxu0 0.0
        %539 = vmatpush1.msra.mxu0 0.0
        %540 = vmatprep.subr.mxu0 0.0
        %541 = vmatpush1.msra.mxu0 0.0
        %542 = vmatprep.subr.mxu0 0.0
        %543 = vmatpush1.msra.mxu0 0.0
        %544 = vmatprep.subr.mxu0 0.0
        %545 = vmatpush1.msra.mxu0 0.0
        %546 = vmatprep.subr.mxu0 0.0
        %547 = vmatpush1.msra.mxu0 0.0
        %548 = vmatprep.subr.mxu0 0.0
        %549 = vmatpush1.msra.mxu0 0.0
        %550 = vmatprep.subr.mxu0 0.0
        %551 = vmatpush1.msra.mxu0 0.0
        %552 = vmatprep.subr.mxu0 0.0
        %553 = vmatpush1.msra.mxu0 0.0
        %554 = vmatprep.subr.mxu0 0.0
        %555 = vmatpush1.msra.mxu0 0.0
        %556 = vmatprep.subr.mxu0 0.0
        %557 = vmatpush1.msra.mxu0 0.0
        %558 = vmatprep.subr.mxu0 0.0
        %559 = vmatpush1.msra.mxu0 0.0
        %560 = vmatprep.subr.mxu0 0.0
        %561 = vmatpush1.msra.mxu0 0.0
        %562 = vmatprep.subr.mxu0 0.0
        %563 = vmatpush1.msra.mxu0 0.0
        %564 = vmatprep.subr.mxu0 0.0
        %565 = vmatpush1.msra.mxu0 0.0
        %566 = vmatprep.subr.mxu0 0.0
        %567 = vmatpush1.msra.mxu0 0.0
        %568 = vmatprep.subr.mxu0 0.0
        %569 = vmatpush1.msra.mxu0 0.0
        %570 = vmatprep.subr.mxu0 0.0
        %571 = vmatpush1.msra.mxu0 0.0
        %572 = vmatprep.subr.mxu0 0.0
        %573 = vmatpush1.msra.mxu0 0.0
        %574 = vmatprep.subr.mxu0 0.0
        %575 = vmatpush1.msra.mxu0 0.0
        %576 = vmatprep.subr.mxu0 0.0
        %577 = vmatpush1.msra.mxu0 0.0
        %578 = vmatprep.mubr.f32.mxu0 0.0
        %579 = vmatmul.mubr.f32.gmra.mrb[0].mxu0 %v512
        %v580 = vpop.f32.mrb[0].mxu0
        %v581 = vadd.f32 0.0, %v580
        %v582 = vpop.f32.mrb[0].mxu0
        %583 = vdwg.mxu0
        %v584 = vmul.f32 %v275, %v275
        %v585 = vmul.f32 %v276, %v276
        %586 = vmatprep.subr.mxu0 0.0
        %587 = vmatpush1.msra.mxu0 %v584
        %588 = vmatprep.subr.mxu0 0.0
        %589 = vmatpush1.msra.mxu0 %v585
        %590 = vmatprep.subr.mxu0 0.0
        %591 = vmatpush1.msra.mxu0 0.0
        %592 = vmatprep.subr.mxu0 0.0
        %593 = vmatpush1.msra.mxu0 0.0
        %594 = vmatprep.subr.mxu0 0.0
        %595 = vmatpush1.msra.mxu0 0.0
        %596 = vmatprep.subr.mxu0 0.0
        %597 = vmatpush1.msra.mxu0 0.0
        %598 = vmatprep.subr.mxu0 0.0
        %599 = vmatpush1.msra.mxu0 0.0
        %600 = vmatprep.subr.mxu0 0.0
        %601 = vmatpush1.msra.mxu0 0.0
        %602 = vmatprep.subr.mxu0 0.0
        %603 = vmatpush1.msra.mxu0 0.0
        %604 = vmatprep.subr.mxu0 0.0
        %605 = vmatpush1.msra.mxu0 0.0
        %606 = vmatprep.subr.mxu0 0.0
        %607 = vmatpush1.msra.mxu0 0.0
        %608 = vmatprep.subr.mxu0 0.0
        %609 = vmatpush1.msra.mxu0 0.0
        %610 = vmatprep.subr.mxu0 0.0
        %611 = vmatpush1.msra.mxu0 0.0
        %612 = vmatprep.subr.mxu0 0.0
        %613 = vmatpush1.msra.mxu0 0.0
        %614 = vmatprep.subr.mxu0 0.0
        %615 = vmatpush1.msra.mxu0 0.0
        %616 = vmatprep.subr.mxu0 0.0
        %617 = vmatpush1.msra.mxu0 0.0
        %618 = vmatprep.subr.mxu0 0.0
        %619 = vmatpush1.msra.mxu0 0.0
        %620 = vmatprep.subr.mxu0 0.0
        %621 = vmatpush1.msra.mxu0 0.0
        %622 = vmatprep.subr.mxu0 0.0
        %623 = vmatpush1.msra.mxu0 0.0
        %624 = vmatprep.subr.mxu0 0.0
        %625 = vmatpush1.msra.mxu0 0.0
        %626 = vmatprep.subr.mxu0 0.0
        %627 = vmatpush1.msra.mxu0 0.0
        %628 = vmatprep.subr.mxu0 0.0
        %629 = vmatpush1.msra.mxu0 0.0
        %630 = vmatprep.subr.mxu0 0.0
        %631 = vmatpush1.msra.mxu0 0.0
        %632 = vmatprep.subr.mxu0 0.0
        %633 = vmatpush1.msra.mxu0 0.0
        %634 = vmatprep.subr.mxu0 0.0
        %635 = vmatpush1.msra.mxu0 0.0
        %636 = vmatprep.subr.mxu0 0.0
        %637 = vmatpush1.msra.mxu0 0.0
        %638 = vmatprep.subr.mxu0 0.0
        %639 = vmatpush1.msra.mxu0 0.0
        %640 = vmatprep.subr.mxu0 0.0
        %641 = vmatpush1.msra.mxu0 0.0
        %642 = vmatprep.subr.mxu0 0.0
        %643 = vmatpush1.msra.mxu0 0.0
        %644 = vmatprep.subr.mxu0 0.0
        %645 = vmatpush1.msra.mxu0 0.0
        %646 = vmatprep.subr.mxu0 0.0
        %647 = vmatpush1.msra.mxu0 0.0
        %648 = vmatprep.subr.mxu0 0.0
        %649 = vmatpush1.msra.mxu0 0.0
        %650 = vmatprep.mubr.f32.mxu0 0.0
        %651 = vmatmul.mubr.f32.gmra.mrb[0].mxu0 %v295
        %v652 = vpop.f32.mrb[0].mxu0
        %v653 = vadd.f32 0.0, %v652
        %v654 = vpop.f32.mrb[0].mxu0
        %655 = vdwg.mxu0
        %v657 = vsel %vm367, %v653, 0
        %659 = vmatprep.subr.mxu0 0.0
        %660 = vmatpush1.msra.mxu0 %v282
        %661 = vmatprep.subr.mxu0 0.0
        %662 = vmatpush1.msra.mxu0 %v283
        %663 = vmatprep.subr.mxu0 0.0
        %664 = vmatpush1.msra.mxu0 %v284
        %665 = vmatprep.subr.mxu0 0.0
        %666 = vmatpush1.msra.mxu0 %v285
        %667 = vmatprep.subr.mxu0 0.0
        %668 = vmatpush1.msra.mxu0 %v286
        %669 = vmatprep.subr.mxu0 0.0
        %670 = vmatpush1.msra.mxu0 %v287
        %671 = vmatprep.subr.mxu0 0.0
        %672 = vmatpush1.msra.mxu0 %v288
        %673 = vmatprep.subr.mxu0 0.0
        %674 = vmatpush1.msra.mxu0 %v289
        %675 = vmatprep.subr.mxu0 0.0
        %676 = vmatpush1.msra.mxu0 0.0
        %677 = vmatprep.subr.mxu0 0.0
        %678 = vmatpush1.msra.mxu0 0.0
        %679 = vmatprep.subr.mxu0 0.0
        %680 = vmatpush1.msra.mxu0 0.0
        %681 = vmatprep.subr.mxu0 0.0
        %682 = vmatpush1.msra.mxu0 0.0
        %683 = vmatprep.subr.mxu0 0.0
        %684 = vmatpush1.msra.mxu0 0.0
        %685 = vmatprep.subr.mxu0 0.0
        %686 = vmatpush1.msra.mxu0 0.0
        %687 = vmatprep.subr.mxu0 0.0
        %688 = vmatpush1.msra.mxu0 0.0
        %689 = vmatprep.subr.mxu0 0.0
        %690 = vmatpush1.msra.mxu0 0.0
        %691 = vmatprep.subr.mxu0 0.0
        %692 = vmatpush1.msra.mxu0 0.0
        %693 = vmatprep.subr.mxu0 0.0
        %694 = vmatpush1.msra.mxu0 0.0
        %695 = vmatprep.subr.mxu0 0.0
        %696 = vmatpush1.msra.mxu0 0.0
        %697 = vmatprep.subr.mxu0 0.0
        %698 = vmatpush1.msra.mxu0 0.0
        %699 = vmatprep.subr.mxu0 0.0
        %700 = vmatpush1.msra.mxu0 0.0
        %701 = vmatprep.subr.mxu0 0.0
        %702 = vmatpush1.msra.mxu0 0.0
        %703 = vmatprep.subr.mxu0 0.0
        %704 = vmatpush1.msra.mxu0 0.0
        %705 = vmatprep.subr.mxu0 0.0
        %706 = vmatpush1.msra.mxu0 0.0
        %707 = vmatprep.subr.mxu0 0.0
        %708 = vmatpush1.msra.mxu0 0.0
        %709 = vmatprep.subr.mxu0 0.0
        %710 = vmatpush1.msra.mxu0 0.0
        %711 = vmatprep.subr.mxu0 0.0
        %712 = vmatpush1.msra.mxu0 0.0
        %713 = vmatprep.subr.mxu0 0.0
        %714 = vmatpush1.msra.mxu0 0.0
        %715 = vmatprep.subr.mxu0 0.0
        %716 = vmatpush1.msra.mxu0 0.0
        %717 = vmatprep.subr.mxu0 0.0
        %718 = vmatpush1.msra.mxu0 0.0
        %719 = vmatprep.subr.mxu0 0.0
        %720 = vmatpush1.msra.mxu0 0.0
        %721 = vmatprep.subr.mxu0 0.0
        %722 = vmatpush1.msra.mxu0 0.0
        %723 = vmatprep.mubr.f32.mxu0 0.0
        %724 = vmatmul.mubr.f32.gmra.mrb[0].mxu0 %v657
        %v725 = vpop.f32.mrb[0].mxu0
        %v726 = vadd.f32 0.0, %v725
        %v727 = vpop.f32.mrb[0].mxu0
        %728 = vdwg.mxu0
        %v729 = vmul.f32 %v438, %v438
        %v730 = vsub.f32 %v726, %v729
        %v731 = vmul.f32 %v277, %v277
        %v732 = vmul.f32 %v278, %v278
        %733 = vmatprep.subr.mxu0 0.0
        %734 = vmatpush1.msra.mxu0 %v731
        %735 = vmatprep.subr.mxu0 0.0
        %736 = vmatpush1.msra.mxu0 %v732
        %737 = vmatprep.subr.mxu0 0.0
        %738 = vmatpush1.msra.mxu0 0.0
        %739 = vmatprep.subr.mxu0 0.0
        %740 = vmatpush1.msra.mxu0 0.0
        %741 = vmatprep.subr.mxu0 0.0
        %742 = vmatpush1.msra.mxu0 0.0
        %743 = vmatprep.subr.mxu0 0.0
        %744 = vmatpush1.msra.mxu0 0.0
        %745 = vmatprep.subr.mxu0 0.0
        %746 = vmatpush1.msra.mxu0 0.0
        %747 = vmatprep.subr.mxu0 0.0
        %748 = vmatpush1.msra.mxu0 0.0
        %749 = vmatprep.subr.mxu0 0.0
        %750 = vmatpush1.msra.mxu0 0.0
        %751 = vmatprep.subr.mxu0 0.0
        %752 = vmatpush1.msra.mxu0 0.0
        %753 = vmatprep.subr.mxu0 0.0
        %754 = vmatpush1.msra.mxu0 0.0
        %755 = vmatprep.subr.mxu0 0.0
        %756 = vmatpush1.msra.mxu0 0.0
        %757 = vmatprep.subr.mxu0 0.0
        %758 = vmatpush1.msra.mxu0 0.0
        %759 = vmatprep.subr.mxu0 0.0
        %760 = vmatpush1.msra.mxu0 0.0
        %761 = vmatprep.subr.mxu0 0.0
        %762 = vmatpush1.msra.mxu0 0.0
        %763 = vmatprep.subr.mxu0 0.0
        %764 = vmatpush1.msra.mxu0 0.0
        %765 = vmatprep.subr.mxu0 0.0
        %766 = vmatpush1.msra.mxu0 0.0
        %767 = vmatprep.subr.mxu0 0.0
        %768 = vmatpush1.msra.mxu0 0.0
        %769 = vmatprep.subr.mxu0 0.0
        %770 = vmatpush1.msra.mxu0 0.0
        %771 = vmatprep.subr.mxu0 0.0
        %772 = vmatpush1.msra.mxu0 0.0
        %773 = vmatprep.subr.mxu0 0.0
        %774 = vmatpush1.msra.mxu0 0.0
        %775 = vmatprep.subr.mxu0 0.0
        %776 = vmatpush1.msra.mxu0 0.0
        %777 = vmatprep.subr.mxu0 0.0
        %778 = vmatpush1.msra.mxu0 0.0
        %779 = vmatprep.subr.mxu0 0.0
        %780 = vmatpush1.msra.mxu0 0.0
        %781 = vmatprep.subr.mxu0 0.0
        %782 = vmatpush1.msra.mxu0 0.0
        %783 = vmatprep.subr.mxu0 0.0
        %784 = vmatpush1.msra.mxu0 0.0
        %785 = vmatprep.subr.mxu0 0.0
        %786 = vmatpush1.msra.mxu0 0.0
        %787 = vmatprep.subr.mxu0 0.0
        %788 = vmatpush1.msra.mxu0 0.0
        %789 = vmatprep.subr.mxu0 0.0
        %790 = vmatpush1.msra.mxu0 0.0
        %791 = vmatprep.subr.mxu0 0.0
        %792 = vmatpush1.msra.mxu0 0.0
        %793 = vmatprep.subr.mxu0 0.0
        %794 = vmatpush1.msra.mxu0 0.0
        %795 = vmatprep.subr.mxu0 0.0
        %796 = vmatpush1.msra.mxu0 0.0
        %797 = vmatprep.mubr.f32.mxu0 0.0
        %798 = vmatmul.mubr.f32.gmra.mrb[0].mxu0 %v295
        %v799 = vpop.f32.mrb[0].mxu0
        %v800 = vadd.f32 0.0, %v799
        %v801 = vpop.f32.mrb[0].mxu0
        %802 = vdwg.mxu0
        %v804 = vsel %vm367, %v800, 0
        %806 = vmatprep.subr.mxu0 0.0
        %807 = vmatpush1.msra.mxu0 %v282
        %808 = vmatprep.subr.mxu0 0.0
        %809 = vmatpush1.msra.mxu0 %v283
        %810 = vmatprep.subr.mxu0 0.0
        %811 = vmatpush1.msra.mxu0 %v284
        %812 = vmatprep.subr.mxu0 0.0
        %813 = vmatpush1.msra.mxu0 %v285
        %814 = vmatprep.subr.mxu0 0.0
        %815 = vmatpush1.msra.mxu0 %v286
        %816 = vmatprep.subr.mxu0 0.0
        %817 = vmatpush1.msra.mxu0 %v287
        %818 = vmatprep.subr.mxu0 0.0
        %819 = vmatpush1.msra.mxu0 %v288
        %820 = vmatprep.subr.mxu0 0.0
        %821 = vmatpush1.msra.mxu0 %v289
        %822 = vmatprep.subr.mxu0 0.0
        %823 = vmatpush1.msra.mxu0 0.0
        %824 = vmatprep.subr.mxu0 0.0
        %825 = vmatpush1.msra.mxu0 0.0
        %826 = vmatprep.subr.mxu0 0.0
        %827 = vmatpush1.msra.mxu0 0.0
        %828 = vmatprep.subr.mxu0 0.0
        %829 = vmatpush1.msra.mxu0 0.0
        %830 = vmatprep.subr.mxu0 0.0
        %831 = vmatpush1.msra.mxu0 0.0
        %832 = vmatprep.subr.mxu0 0.0
        %833 = vmatpush1.msra.mxu0 0.0
        %834 = vmatprep.subr.mxu0 0.0
        %835 = vmatpush1.msra.mxu0 0.0
        %836 = vmatprep.subr.mxu0 0.0
        %837 = vmatpush1.msra.mxu0 0.0
        %838 = vmatprep.subr.mxu0 0.0
        %839 = vmatpush1.msra.mxu0 0.0
        %840 = vmatprep.subr.mxu0 0.0
        %841 = vmatpush1.msra.mxu0 0.0
        %842 = vmatprep.subr.mxu0 0.0
        %843 = vmatpush1.msra.mxu0 0.0
        %844 = vmatprep.subr.mxu0 0.0
        %845 = vmatpush1.msra.mxu0 0.0
        %846 = vmatprep.subr.mxu0 0.0
        %847 = vmatpush1.msra.mxu0 0.0
        %848 = vmatprep.subr.mxu0 0.0
        %849 = vmatpush1.msra.mxu0 0.0
        %850 = vmatprep.subr.mxu0 0.0
        %851 = vmatpush1.msra.mxu0 0.0
        %852 = vmatprep.subr.mxu0 0.0
        %853 = vmatpush1.msra.mxu0 0.0
        %854 = vmatprep.subr.mxu0 0.0
        %855 = vmatpush1.msra.mxu0 0.0
        %856 = vmatprep.subr.mxu0 0.0
        %857 = vmatpush1.msra.mxu0 0.0
        %858 = vmatprep.subr.mxu0 0.0
        %859 = vmatpush1.msra.mxu0 0.0
        %860 = vmatprep.subr.mxu0 0.0
        %861 = vmatpush1.msra.mxu0 0.0
        %862 = vmatprep.subr.mxu0 0.0
        %863 = vmatpush1.msra.mxu0 0.0
        %864 = vmatprep.subr.mxu0 0.0
        %865 = vmatpush1.msra.mxu0 0.0
        %866 = vmatprep.subr.mxu0 0.0
        %867 = vmatpush1.msra.mxu0 0.0
        %868 = vmatprep.subr.mxu0 0.0
        %869 = vmatpush1.msra.mxu0 0.0
        %870 = vmatprep.mubr.f32.mxu0 0.0
        %871 = vmatmul.mubr.f32.gmra.mrb[0].mxu0 %v804
        %v872 = vpop.f32.mrb[0].mxu0
        %v873 = vadd.f32 0.0, %v872
        %v874 = vpop.f32.mrb[0].mxu0
        %875 = vdwg.mxu0
        %v876 = vmul.f32 %v581, %v581
        %v877 = vsub.f32 %v873, %v876
        %v878 = vmul.f32 %v275, %v277
        %v879 = vmul.f32 %v276, %v278
        %880 = vmatprep.subr.mxu0 0.0
        %881 = vmatpush1.msra.mxu0 %v878
        %882 = vmatprep.subr.mxu0 0.0
        %883 = vmatpush1.msra.mxu0 %v879
        %884 = vmatprep.subr.mxu0 0.0
        %885 = vmatpush1.msra.mxu0 0.0
        %886 = vmatprep.subr.mxu0 0.0
        %887 = vmatpush1.msra.mxu0 0.0
        %888 = vmatprep.subr.mxu0 0.0
        %889 = vmatpush1.msra.mxu0 0.0
        %890 = vmatprep.subr.mxu0 0.0
        %891 = vmatpush1.msra.mxu0 0.0
        %892 = vmatprep.subr.mxu0 0.0
        %893 = vmatpush1.msra.mxu0 0.0
        %894 = vmatprep.subr.mxu0 0.0
        %895 = vmatpush1.msra.mxu0 0.0
        %896 = vmatprep.subr.mxu0 0.0
        %897 = vmatpush1.msra.mxu0 0.0
        %898 = vmatprep.subr.mxu0 0.0
        %899 = vmatpush1.msra.mxu0 0.0
        %900 = vmatprep.subr.mxu0 0.0
        %901 = vmatpush1.msra.mxu0 0.0
        %902 = vmatprep.subr.mxu0 0.0
        %903 = vmatpush1.msra.mxu0 0.0
        %904 = vmatprep.subr.mxu0 0.0
        %905 = vmatpush1.msra.mxu0 0.0
        %906 = vmatprep.subr.mxu0 0.0
        %907 = vmatpush1.msra.mxu0 0.0
        %908 = vmatprep.subr.mxu0 0.0
        %909 = vmatpush1.msra.mxu0 0.0
        %910 = vmatprep.subr.mxu0 0.0
        %911 = vmatpush1.msra.mxu0 0.0
        %912 = vmatprep.subr.mxu0 0.0
        %913 = vmatpush1.msra.mxu0 0.0
        %914 = vmatprep.subr.mxu0 0.0
        %915 = vmatpush1.msra.mxu0 0.0
        %916 = vmatprep.subr.mxu0 0.0
        %917 = vmatpush1.msra.mxu0 0.0
        %918 = vmatprep.subr.mxu0 0.0
        %919 = vmatpush1.msra.mxu0 0.0
        %920 = vmatprep.subr.mxu0 0.0
        %921 = vmatpush1.msra.mxu0 0.0
        %922 = vmatprep.subr.mxu0 0.0
        %923 = vmatpush1.msra.mxu0 0.0
        %924 = vmatprep.subr.mxu0 0.0
        %925 = vmatpush1.msra.mxu0 0.0
        %926 = vmatprep.subr.mxu0 0.0
        %927 = vmatpush1.msra.mxu0 0.0
        %928 = vmatprep.subr.mxu0 0.0
        %929 = vmatpush1.msra.mxu0 0.0
        %930 = vmatprep.subr.mxu0 0.0
        %931 = vmatpush1.msra.mxu0 0.0
        %932 = vmatprep.subr.mxu0 0.0
        %933 = vmatpush1.msra.mxu0 0.0
        %934 = vmatprep.subr.mxu0 0.0
        %935 = vmatpush1.msra.mxu0 0.0
        %936 = vmatprep.subr.mxu0 0.0
        %937 = vmatpush1.msra.mxu0 0.0
        %938 = vmatprep.subr.mxu0 0.0
        %939 = vmatpush1.msra.mxu0 0.0
        %940 = vmatprep.subr.mxu0 0.0
        %941 = vmatpush1.msra.mxu0 0.0
        %942 = vmatprep.subr.mxu0 0.0
        %943 = vmatpush1.msra.mxu0 0.0
        %944 = vmatprep.mubr.f32.mxu0 0.0
        %945 = vmatmul.mubr.f32.gmra.mrb[0].mxu0 %v295
        %v946 = vpop.f32.mrb[0].mxu0
        %v947 = vadd.f32 0.0, %v946
        %v948 = vpop.f32.mrb[0].mxu0
        %949 = vdwg.mxu0
        %v951 = vsel %vm367, %v947, 0
        %953 = vmatprep.subr.mxu0 0.0
        %954 = vmatpush1.msra.mxu0 %v282
        %955 = vmatprep.subr.mxu0 0.0
        %956 = vmatpush1.msra.mxu0 %v283
        %957 = vmatprep.subr.mxu0 0.0
        %958 = vmatpush1.msra.mxu0 %v284
        %959 = vmatprep.subr.mxu0 0.0
        %960 = vmatpush1.msra.mxu0 %v285
        %961 = vmatprep.subr.mxu0 0.0
        %962 = vmatpush1.msra.mxu0 %v286
        %963 = vmatprep.subr.mxu0 0.0
        %964 = vmatpush1.msra.mxu0 %v287
        %965 = vmatprep.subr.mxu0 0.0
        %966 = vmatpush1.msra.mxu0 %v288
        %967 = vmatprep.subr.mxu0 0.0
        %968 = vmatpush1.msra.mxu0 %v289
        %969 = vmatprep.subr.mxu0 0.0
        %970 = vmatpush1.msra.mxu0 0.0
        %971 = vmatprep.subr.mxu0 0.0
        %972 = vmatpush1.msra.mxu0 0.0
        %973 = vmatprep.subr.mxu0 0.0
        %974 = vmatpush1.msra.mxu0 0.0
        %975 = vmatprep.subr.mxu0 0.0
        %976 = vmatpush1.msra.mxu0 0.0
        %977 = vmatprep.subr.mxu0 0.0
        %978 = vmatpush1.msra.mxu0 0.0
        %979 = vmatprep.subr.mxu0 0.0
        %980 = vmatpush1.msra.mxu0 0.0
        %981 = vmatprep.subr.mxu0 0.0
        %982 = vmatpush1.msra.mxu0 0.0
        %983 = vmatprep.subr.mxu0 0.0
        %984 = vmatpush1.msra.mxu0 0.0
        %985 = vmatprep.subr.mxu0 0.0
        %986 = vmatpush1.msra.mxu0 0.0
        %987 = vmatprep.subr.mxu0 0.0
        %988 = vmatpush1.msra.mxu0 0.0
        %989 = vmatprep.subr.mxu0 0.0
        %990 = vmatpush1.msra.mxu0 0.0
        %991 = vmatprep.subr.mxu0 0.0
        %992 = vmatpush1.msra.mxu0 0.0
        %993 = vmatprep.subr.mxu0 0.0
        %994 = vmatpush1.msra.mxu0 0.0
        %995 = vmatprep.subr.mxu0 0.0
        %996 = vmatpush1.msra.mxu0 0.0
        %997 = vmatprep.subr.mxu0 0.0
        %998 = vmatpush1.msra.mxu0 0.0
        %999 = vmatprep.subr.mxu0 0.0
        %1000 = vmatpush1.msra.mxu0 0.0
        %1001 = vmatprep.subr.mxu0 0.0
        %1002 = vmatpush1.msra.mxu0 0.0
        %1003 = vmatprep.subr.mxu0 0.0
        %1004 = vmatpush1.msra.mxu0 0.0
        %1005 = vmatprep.subr.mxu0 0.0
        %1006 = vmatpush1.msra.mxu0 0.0
        %1007 = vmatprep.subr.mxu0 0.0
        %1008 = vmatpush1.msra.mxu0 0.0
        %1009 = vmatprep.subr.mxu0 0.0
        %1010 = vmatpush1.msra.mxu0 0.0
        %1011 = vmatprep.subr.mxu0 0.0
        %1012 = vmatpush1.msra.mxu0 0.0
        %1013 = vmatprep.subr.mxu0 0.0
        %1014 = vmatpush1.msra.mxu0 0.0
        %1015 = vmatprep.subr.mxu0 0.0
        %1016 = vmatpush1.msra.mxu0 0.0
        %1017 = vmatprep.mubr.f32.mxu0 0.0
        %1018 = vmatmul.mubr.f32.gmra.mrb[0].mxu0 %v951
        %v1019 = vpop.f32.mrb[0].mxu0
        %v1020 = vadd.f32 0.0, %v1019
        %v1021 = vpop.f32.mrb[0].mxu0
        %1022 = vdwg.mxu0
        %v1023 = vmul.f32 %v438, %v581
        %v1024 = vsub.f32 %v1020, %v1023
        %v1025 = vmul.f32 %v438, 2.0
        %v1026 = vmul.f32 %v1025, %v581
        %v1027 = vadd.f32 %v1026, 0.01
        %v1028 = vmul.f32 %v1024, 2.0
        %v1029 = vadd.f32 %v1028, 0.09
        %v1030 = vadd.f32 %v729, %v876
        %v1031 = vadd.f32 %v1030, 0.01
        %v1032 = vadd.f32 %v730, %v877
        %v1033 = vadd.f32 %v1032, 0.09
        %v1034 = vrcp.pop %v1031
        %v1035 = vrcp.pop %v1033
        %v1036 = vmul.f32 %v1034, %v1035
        %v1037 = vmul.f32 %v581, 2.0
        %v1038 = vmul.f32 %v1037, %v1029
        %v1039 = vmul.f32 %v1038, %v1036
        %v1040 = vmul.f32 %v1025, %v1027
        %v1041 = vmul.f32 %v1040, %v1029
        %v1042 = vmul.f32 %v1041, %v1036
        %v1043 = vmul.f32 %v1042, %v1034
        %v1044 = vsub.f32 %v1039, %v1043
        %v1045 = vsub.f32 0.0, %v1027
        %v1046 = vmul.f32 %v1045, %v1029
        %v1047 = vmul.f32 %v1046, %v1036
        %v1048 = vmul.f32 %v1047, %v1035
        %v1049 = vmul.f32 %v1027, 2.0
        %v1050 = vmul.f32 %v1049, %v1036
        %v1051 = vmul.f32 %v1025, %v1048
        %v1052 = vsub.f32 %v1044, %v1051
        %v1053 = vmul.f32 %v581, %v1050
        %v1054 = vsub.f32 %v1052, %v1053
        %v1055 = vmul.f32 %v1048, 2.0
        %vm1056 = vcmask 48128
        %v1058 = vsel %vm1056, %v280, 0
        %v1061 = vsel %vm1056, %v281, 0
        %vm1063 = vcmask 1045504
        %v1065 = vsel %vm1063, %v1054, 0
        %1067 = vmatprep.subr.mxu0 0.0
        %1068 = vmatpush1.msra.mxu0 %v1065
        %1069 = vmatprep.subr.mxu0 0.0
        %1070 = vmatpush1.msra.mxu0 0.0
        %1071 = vmatprep.subr.mxu0 0.0
        %1072 = vmatpush1.msra.mxu0 0.0
        %1073 = vmatprep.subr.mxu0 0.0
        %1074 = vmatpush1.msra.mxu0 0.0
        %1075 = vmatprep.subr.mxu0 0.0
        %1076 = vmatpush1.msra.mxu0 0.0
        %1077 = vmatprep.subr.mxu0 0.0
        %1078 = vmatpush1.msra.mxu0 0.0
        %1079 = vmatprep.subr.mxu0 0.0
        %1080 = vmatpush1.msra.mxu0 0.0
        %1081 = vmatprep.subr.mxu0 0.0
        %1082 = vmatpush1.msra.mxu0 0.0
        %1083 = vmatprep.subr.mxu0 0.0
        %1084 = vmatpush1.msra.mxu0 0.0
        %1085 = vmatprep.subr.mxu0 0.0
        %1086 = vmatpush1.msra.mxu0 0.0
        %1087 = vmatprep.subr.mxu0 0.0
        %1088 = vmatpush1.msra.mxu0 0.0
        %1089 = vmatprep.subr.mxu0 0.0
        %1090 = vmatpush1.msra.mxu0 0.0
        %1091 = vmatprep.subr.mxu0 0.0
        %1092 = vmatpush1.msra.mxu0 0.0
        %1093 = vmatprep.subr.mxu0 0.0
        %1094 = vmatpush1.msra.mxu0 0.0
        %1095 = vmatprep.subr.mxu0 0.0
        %1096 = vmatpush1.msra.mxu0 0.0
        %1097 = vmatprep.subr.mxu0 0.0
        %1098 = vmatpush1.msra.mxu0 0.0
        %1099 = vmatprep.subr.mxu0 0.0
        %1100 = vmatpush1.msra.mxu0 0.0
        %1101 = vmatprep.subr.mxu0 0.0
        %1102 = vmatpush1.msra.mxu0 0.0
        %1103 = vmatprep.subr.mxu0 0.0
        %1104 = vmatpush1.msra.mxu0 0.0
        %1105 = vmatprep.subr.mxu0 0.0
        %1106 = vmatpush1.msra.mxu0 0.0
        %1107 = vmatprep.subr.mxu0 0.0
        %1108 = vmatpush1.msra.mxu0 0.0
        %1109 = vmatprep.subr.mxu0 0.0
        %1110 = vmatpush1.msra.mxu0 0.0
        %1111 = vmatprep.subr.mxu0 0.0
        %1112 = vmatpush1.msra.mxu0 0.0
        %1113 = vmatprep.subr.mxu0 0.0
        %1114 = vmatpush1.msra.mxu0 0.0
        %1115 = vmatprep.subr.mxu0 0.0
        %1116 = vmatpush1.msra.mxu0 0.0
        %1117 = vmatprep.subr.mxu0 0.0
        %1118 = vmatpush1.msra.mxu0 0.0
        %1119 = vmatprep.subr.mxu0 0.0
        %1120 = vmatpush1.msra.mxu0 0.0
        %1121 = vmatprep.subr.mxu0 0.0
        %1122 = vmatpush1.msra.mxu0 0.0
        %1123 = vmatprep.subr.mxu0 0.0
        %1124 = vmatpush1.msra.mxu0 0.0
        %1125 = vmatprep.subr.mxu0 0.0
        %1126 = vmatpush1.msra.mxu0 0.0
        %1127 = vmatprep.subr.mxu0 0.0
        %1128 = vmatpush1.msra.mxu0 0.0
        %1129 = vmatprep.subr.mxu0 0.0
        %1130 = vmatpush1.msra.mxu0 0.0
        %1131 = vmatprep.mubr.f32.mxu0 0.0
        %1132 = vmatmul.mubr.f32.gmra.mrb[0].mxu0 %v1058
        %v1133 = vpop.f32.mrb[0].mxu0
        %v1134 = vadd.f32 0.0, %v1133
        %v1135 = vpop.f32.mrb[0].mxu0
        %1136 = vmatprep.mubr.f32.mxu0 0.0
        %1137 = vmatmul.mubr.f32.gmra.mrb[0].mxu0 %v1061
        %v1138 = vpop.f32.mrb[0].mxu0
        %v1139 = vadd.f32 0.0, %v1138
        %v1140 = vpop.f32.mrb[0].mxu0
        %1141 = vdwg.mxu0
        %v1143 = vsel %vm1063, %v1055, 0
        %1145 = vmatprep.subr.mxu0 0.0
        %1146 = vmatpush1.msra.mxu0 %v1143
        %1147 = vmatprep.subr.mxu0 0.0
        %1148 = vmatpush1.msra.mxu0 0.0
        %1149 = vmatprep.subr.mxu0 0.0
        %1150 = vmatpush1.msra.mxu0 0.0
        %1151 = vmatprep.subr.mxu0 0.0
        %1152 = vmatpush1.msra.mxu0 0.0
        %1153 = vmatprep.subr.mxu0 0.0
        %1154 = vmatpush1.msra.mxu0 0.0
        %1155 = vmatprep.subr.mxu0 0.0
        %1156 = vmatpush1.msra.mxu0 0.0
        %1157 = vmatprep.subr.mxu0 0.0
        %1158 = vmatpush1.msra.mxu0 0.0
        %1159 = vmatprep.subr.mxu0 0.0
        %1160 = vmatpush1.msra.mxu0 0.0
        %1161 = vmatprep.subr.mxu0 0.0
        %1162 = vmatpush1.msra.mxu0 0.0
        %1163 = vmatprep.subr.mxu0 0.0
        %1164 = vmatpush1.msra.mxu0 0.0
        %1165 = vmatprep.subr.mxu0 0.0
        %1166 = vmatpush1.msra.mxu0 0.0
        %1167 = vmatprep.subr.mxu0 0.0
        %1168 = vmatpush1.msra.mxu0 0.0
        %1169 = vmatprep.subr.mxu0 0.0
        %1170 = vmatpush1.msra.mxu0 0.0
        %1171 = vmatprep.subr.mxu0 0.0
        %1172 = vmatpush1.msra.mxu0 0.0
        %1173 = vmatprep.subr.mxu0 0.0
        %1174 = vmatpush1.msra.mxu0 0.0
        %1175 = vmatprep.subr.mxu0 0.0
        %1176 = vmatpush1.msra.mxu0 0.0
        %1177 = vmatprep.subr.mxu0 0.0
        %1178 = vmatpush1.msra.mxu0 0.0
        %1179 = vmatprep.subr.mxu0 0.0
        %1180 = vmatpush1.msra.mxu0 0.0
        %1181 = vmatprep.subr.mxu0 0.0
        %1182 = vmatpush1.msra.mxu0 0.0
        %1183 = vmatprep.subr.mxu0 0.0
        %1184 = vmatpush1.msra.mxu0 0.0
        %1185 = vmatprep.subr.mxu0 0.0
        %1186 = vmatpush1.msra.mxu0 0.0
        %1187 = vmatprep.subr.mxu0 0.0
        %1188 = vmatpush1.msra.mxu0 0.0
        %1189 = vmatprep.subr.mxu0 0.0
        %1190 = vmatpush1.msra.mxu0 0.0
        %1191 = vmatprep.subr.mxu0 0.0
        %1192 = vmatpush1.msra.mxu0 0.0
        %1193 = vmatprep.subr.mxu0 0.0
        %1194 = vmatpush1.msra.mxu0 0.0
        %1195 = vmatprep.subr.mxu0 0.0
        %1196 = vmatpush1.msra.mxu0 0.0
        %1197 = vmatprep.subr.mxu0 0.0
        %1198 = vmatpush1.msra.mxu0 0.0
        %1199 = vmatprep.subr.mxu0 0.0
        %1200 = vmatpush1.msra.mxu0 0.0
        %1201 = vmatprep.subr.mxu0 0.0
        %1202 = vmatpush1.msra.mxu0 0.0
        %1203 = vmatprep.subr.mxu0 0.0
        %1204 = vmatpush1.msra.mxu0 0.0
        %1205 = vmatprep.subr.mxu0 0.0
        %1206 = vmatpush1.msra.mxu0 0.0
        %1207 = vmatprep.subr.mxu0 0.0
        %1208 = vmatpush1.msra.mxu0 0.0
        %1209 = vmatprep.mubr.f32.mxu0 0.0
        %1210 = vmatmul.mubr.f32.gmra.mrb[0].mxu0 %v1058
        %v1211 = vpop.f32.mrb[0].mxu0
        %v1212 = vadd.f32 0.0, %v1211
        %v1213 = vpop.f32.mrb[0].mxu0
        %1214 = vmatprep.mubr.f32.mxu0 0.0
        %1215 = vmatmul.mubr.f32.gmra.mrb[0].mxu0 %v1061
        %v1216 = vpop.f32.mrb[0].mxu0
        %v1217 = vadd.f32 0.0, %v1216
        %v1218 = vpop.f32.mrb[0].mxu0
        %1219 = vdwg.mxu0
        %vm1220 = vcmask 195584
        %v1222 = vsel %vm1220, %v1212, 0
        %v1225 = vsel %vm1220, %v1217, 0
        %1227 = vmatprep.subr.mxu0 0.0
        %1228 = vmatpush1.msra.mxu0 %v290
        %1229 = vmatprep.subr.mxu0 0.0
        %1230 = vmatpush1.msra.mxu0 %v291
        %1231 = vmatprep.subr.mxu0 0.0
        %1232 = vmatpush1.msra.mxu0 %v292
        %1233 = vmatprep.subr.mxu0 0.0
        %1234 = vmatpush1.msra.mxu0 0.0
        %1235 = vmatprep.subr.mxu0 0.0
        %1236 = vmatpush1.msra.mxu0 0.0
        %1237 = vmatprep.subr.mxu0 0.0
        %1238 = vmatpush1.msra.mxu0 0.0
        %1239 = vmatprep.subr.mxu0 0.0
        %1240 = vmatpush1.msra.mxu0 0.0
        %1241 = vmatprep.subr.mxu0 0.0
        %1242 = vmatpush1.msra.mxu0 0.0
        %1243 = vmatprep.subr.mxu0 0.0
        %1244 = vmatpush1.msra.mxu0 0.0
        %1245 = vmatprep.subr.mxu0 0.0
        %1246 = vmatpush1.msra.mxu0 0.0
        %1247 = vmatprep.subr.mxu0 0.0
        %1248 = vmatpush1.msra.mxu0 0.0
        %1249 = vmatprep.subr.mxu0 0.0
        %1250 = vmatpush1.msra.mxu0 0.0
        %1251 = vmatprep.subr.mxu0 0.0
        %1252 = vmatpush1.msra.mxu0 0.0
        %1253 = vmatprep.subr.mxu0 0.0
        %1254 = vmatpush1.msra.mxu0 0.0
        %1255 = vmatprep.subr.mxu0 0.0
        %1256 = vmatpush1.msra.mxu0 0.0
        %1257 = vmatprep.subr.mxu0 0.0
        %1258 = vmatpush1.msra.mxu0 0.0
        %1259 = vmatprep.subr.mxu0 0.0
        %1260 = vmatpush1.msra.mxu0 0.0
        %1261 = vmatprep.subr.mxu0 0.0
        %1262 = vmatpush1.msra.mxu0 0.0
        %1263 = vmatprep.subr.mxu0 0.0
        %1264 = vmatpush1.msra.mxu0 0.0
        %1265 = vmatprep.subr.mxu0 0.0
        %1266 = vmatpush1.msra.mxu0 0.0
        %1267 = vmatprep.subr.mxu0 0.0
        %1268 = vmatpush1.msra.mxu0 0.0
        %1269 = vmatprep.subr.mxu0 0.0
        %1270 = vmatpush1.msra.mxu0 0.0
        %1271 = vmatprep.subr.mxu0 0.0
        %1272 = vmatpush1.msra.mxu0 0.0
        %1273 = vmatprep.subr.mxu0 0.0
        %1274 = vmatpush1.msra.mxu0 0.0
        %1275 = vmatprep.subr.mxu0 0.0
        %1276 = vmatpush1.msra.mxu0 0.0
        %1277 = vmatprep.subr.mxu0 0.0
        %1278 = vmatpush1.msra.mxu0 0.0
        %1279 = vmatprep.subr.mxu0 0.0
        %1280 = vmatpush1.msra.mxu0 0.0
        %1281 = vmatprep.subr.mxu0 0.0
        %1282 = vmatpush1.msra.mxu0 0.0
        %1283 = vmatprep.subr.mxu0 0.0
        %1284 = vmatpush1.msra.mxu0 0.0
        %1285 = vmatprep.subr.mxu0 0.0
        %1286 = vmatpush1.msra.mxu0 0.0
        %1287 = vmatprep.subr.mxu0 0.0
        %1288 = vmatpush1.msra.mxu0 0.0
        %1289 = vmatprep.subr.mxu0 0.0
        %1290 = vmatpush1.msra.mxu0 0.0
        %1291 = vmatprep.mubr.f32.mxu0 0.0
        %1292 = vmatmul.mubr.f32.gmra.mrb[0].mxu0 %v1222
        %v1293 = vpop.f32.mrb[0].mxu0
        %v1294 = vadd.f32 0.0, %v1293
        %v1295 = vpop.f32.mrb[0].mxu0
        %1296 = vmatprep.mubr.f32.mxu0 0.0
        %1297 = vmatmul.mubr.f32.gmra.mrb[0].mxu0 %v1225
        %v1298 = vpop.f32.mrb[0].mxu0
        %v1299 = vadd.f32 0.0, %v1298
        %v1300 = vpop.f32.mrb[0].mxu0
        %1301 = vdwg.mxu0
        %v1302 = vmul.f32 %v275, %v1294
        %v1303 = vmul.f32 %v276, %v1299
        %v1305 = vsel %vm1220, %v1134, 0
        %v1308 = vsel %vm1220, %v1139, 0
        %1310 = vmatprep.subr.mxu0 0.0
        %1311 = vmatpush1.msra.mxu0 %v290
        %1312 = vmatprep.subr.mxu0 0.0
        %1313 = vmatpush1.msra.mxu0 %v291
        %1314 = vmatprep.subr.mxu0 0.0
        %1315 = vmatpush1.msra.mxu0 %v292
        %1316 = vmatprep.subr.mxu0 0.0
        %1317 = vmatpush1.msra.mxu0 0.0
        %1318 = vmatprep.subr.mxu0 0.0
        %1319 = vmatpush1.msra.mxu0 0.0
        %1320 = vmatprep.subr.mxu0 0.0
        %1321 = vmatpush1.msra.mxu0 0.0
        %1322 = vmatprep.subr.mxu0 0.0
        %1323 = vmatpush1.msra.mxu0 0.0
        %1324 = vmatprep.subr.mxu0 0.0
        %1325 = vmatpush1.msra.mxu0 0.0
        %1326 = vmatprep.subr.mxu0 0.0
        %1327 = vmatpush1.msra.mxu0 0.0
        %1328 = vmatprep.subr.mxu0 0.0
        %1329 = vmatpush1.msra.mxu0 0.0
        %1330 = vmatprep.subr.mxu0 0.0
        %1331 = vmatpush1.msra.mxu0 0.0
        %1332 = vmatprep.subr.mxu0 0.0
        %1333 = vmatpush1.msra.mxu0 0.0
        %1334 = vmatprep.subr.mxu0 0.0
        %1335 = vmatpush1.msra.mxu0 0.0
        %1336 = vmatprep.subr.mxu0 0.0
        %1337 = vmatpush1.msra.mxu0 0.0
        %1338 = vmatprep.subr.mxu0 0.0
        %1339 = vmatpush1.msra.mxu0 0.0
        %1340 = vmatprep.subr.mxu0 0.0
        %1341 = vmatpush1.msra.mxu0 0.0
        %1342 = vmatprep.subr.mxu0 0.0
        %1343 = vmatpush1.msra.mxu0 0.0
        %1344 = vmatprep.subr.mxu0 0.0
        %1345 = vmatpush1.msra.mxu0 0.0
        %1346 = vmatprep.subr.mxu0 0.0
        %1347 = vmatpush1.msra.mxu0 0.0
        %1348 = vmatprep.subr.mxu0 0.0
        %1349 = vmatpush1.msra.mxu0 0.0
        %1350 = vmatprep.subr.mxu0 0.0
        %1351 = vmatpush1.msra.mxu0 0.0
        %1352 = vmatprep.subr.mxu0 0.0
        %1353 = vmatpush1.msra.mxu0 0.0
        %1354 = vmatprep.subr.mxu0 0.0
        %1355 = vmatpush1.msra.mxu0 0.0
        %1356 = vmatprep.subr.mxu0 0.0
        %1357 = vmatpush1.msra.mxu0 0.0
        %1358 = vmatprep.subr.mxu0 0.0
        %1359 = vmatpush1.msra.mxu0 0.0
        %1360 = vmatprep.subr.mxu0 0.0
        %1361 = vmatpush1.msra.mxu0 0.0
        %1362 = vmatprep.subr.mxu0 0.0
        %1363 = vmatpush1.msra.mxu0 0.0
        %1364 = vmatprep.subr.mxu0 0.0
        %1365 = vmatpush1.msra.mxu0 0.0
        %1366 = vmatprep.subr.mxu0 0.0
        %1367 = vmatpush1.msra.mxu0 0.0
        %1368 = vmatprep.subr.mxu0 0.0
        %1369 = vmatpush1.msra.mxu0 0.0
        %1370 = vmatprep.subr.mxu0 0.0
        %1371 = vmatpush1.msra.mxu0 0.0
        %1372 = vmatprep.subr.mxu0 0.0
        %1373 = vmatpush1.msra.mxu0 0.0
        %1374 = vmatprep.mubr.f32.mxu0 0.0
        %1375 = vmatmul.mubr.f32.gmra.mrb[0].mxu0 %v1305
        %v1376 = vpop.f32.mrb[0].mxu0
        %v1377 = vadd.f32 %v1302, %v1376
        %v1378 = vpop.f32.mrb[0].mxu0
        %1379 = vmatprep.mubr.f32.mxu0 0.0
        %1380 = vmatmul.mubr.f32.gmra.mrb[0].mxu0 %v1308
        %v1381 = vpop.f32.mrb[0].mxu0
        %v1382 = vadd.f32 %v1303, %v1381
        %v1383 = vpop.f32.mrb[0].mxu0
        %1384 = vdwg.mxu0
        %v1386 = vsel %vm1063, %v1050, 0
        %1388 = vmatprep.subr.mxu0 0.0
        %1389 = vmatpush1.msra.mxu0 %v1386
        %1390 = vmatprep.subr.mxu0 0.0
        %1391 = vmatpush1.msra.mxu0 0.0
        %1392 = vmatprep.subr.mxu0 0.0
        %1393 = vmatpush1.msra.mxu0 0.0
        %1394 = vmatprep.subr.mxu0 0.0
        %1395 = vmatpush1.msra.mxu0 0.0
        %1396 = vmatprep.subr.mxu0 0.0
        %1397 = vmatpush1.msra.mxu0 0.0
        %1398 = vmatprep.subr.mxu0 0.0
        %1399 = vmatpush1.msra.mxu0 0.0
        %1400 = vmatprep.subr.mxu0 0.0
        %1401 = vmatpush1.msra.mxu0 0.0
        %1402 = vmatprep.subr.mxu0 0.0
        %1403 = vmatpush1.msra.mxu0 0.0
        %1404 = vmatprep.subr.mxu0 0.0
        %1405 = vmatpush1.msra.mxu0 0.0
        %1406 = vmatprep.subr.mxu0 0.0
        %1407 = vmatpush1.msra.mxu0 0.0
        %1408 = vmatprep.subr.mxu0 0.0
        %1409 = vmatpush1.msra.mxu0 0.0
        %1410 = vmatprep.subr.mxu0 0.0
        %1411 = vmatpush1.msra.mxu0 0.0
        %1412 = vmatprep.subr.mxu0 0.0
        %1413 = vmatpush1.msra.mxu0 0.0
        %1414 = vmatprep.subr.mxu0 0.0
        %1415 = vmatpush1.msra.mxu0 0.0
        %1416 = vmatprep.subr.mxu0 0.0
        %1417 = vmatpush1.msra.mxu0 0.0
        %1418 = vmatprep.subr.mxu0 0.0
        %1419 = vmatpush1.msra.mxu0 0.0
        %1420 = vmatprep.subr.mxu0 0.0
        %1421 = vmatpush1.msra.mxu0 0.0
        %1422 = vmatprep.subr.mxu0 0.0
        %1423 = vmatpush1.msra.mxu0 0.0
        %1424 = vmatprep.subr.mxu0 0.0
        %1425 = vmatpush1.msra.mxu0 0.0
        %1426 = vmatprep.subr.mxu0 0.0
        %1427 = vmatpush1.msra.mxu0 0.0
        %1428 = vmatprep.subr.mxu0 0.0
        %1429 = vmatpush1.msra.mxu0 0.0
        %1430 = vmatprep.subr.mxu0 0.0
        %1431 = vmatpush1.msra.mxu0 0.0
        %1432 = vmatprep.subr.mxu0 0.0
        %1433 = vmatpush1.msra.mxu0 0.0
        %1434 = vmatprep.subr.mxu0 0.0
        %1435 = vmatpush1.msra.mxu0 0.0
        %1436 = vmatprep.subr.mxu0 0.0
        %1437 = vmatpush1.msra.mxu0 0.0
        %1438 = vmatprep.subr.mxu0 0.0
        %1439 = vmatpush1.msra.mxu0 0.0
        %1440 = vmatprep.subr.mxu0 0.0
        %1441 = vmatpush1.msra.mxu0 0.0
        %1442 = vmatprep.subr.mxu0 0.0
        %1443 = vmatpush1.msra.mxu0 0.0
        %1444 = vmatprep.subr.mxu0 0.0
        %1445 = vmatpush1.msra.mxu0 0.0
        %1446 = vmatprep.subr.mxu0 0.0
        %1447 = vmatpush1.msra.mxu0 0.0
        %1448 = vmatprep.subr.mxu0 0.0
        %1449 = vmatpush1.msra.mxu0 0.0
        %1450 = vmatprep.subr.mxu0 0.0
        %1451 = vmatpush1.msra.mxu0 0.0
        %1452 = vmatprep.mubr.f32.mxu0 0.0
        %1453 = vmatmul.mubr.f32.gmra.mrb[0].mxu0 %v1058
        %v1454 = vpop.f32.mrb[0].mxu0
        %v1455 = vadd.f32 0.0, %v1454
        %v1456 = vpop.f32.mrb[0].mxu0
        %1457 = vmatprep.mubr.f32.mxu0 0.0
        %1458 = vmatmul.mubr.f32.gmra.mrb[0].mxu0 %v1061
        %v1459 = vpop.f32.mrb[0].mxu0
        %v1460 = vadd.f32 0.0, %v1459
        %v1461 = vpop.f32.mrb[0].mxu0
        %1462 = vdwg.mxu0
        %v1464 = vsel %vm1220, %v1455, 0
        %v1467 = vsel %vm1220, %v1460, 0
        %1469 = vmatprep.subr.mxu0 0.0
        %1470 = vmatpush1.msra.mxu0 %v290
        %1471 = vmatprep.subr.mxu0 0.0
        %1472 = vmatpush1.msra.mxu0 %v291
        %1473 = vmatprep.subr.mxu0 0.0
        %1474 = vmatpush1.msra.mxu0 %v292
        %1475 = vmatprep.subr.mxu0 0.0
        %1476 = vmatpush1.msra.mxu0 0.0
        %1477 = vmatprep.subr.mxu0 0.0
        %1478 = vmatpush1.msra.mxu0 0.0
        %1479 = vmatprep.subr.mxu0 0.0
        %1480 = vmatpush1.msra.mxu0 0.0
        %1481 = vmatprep.subr.mxu0 0.0
        %1482 = vmatpush1.msra.mxu0 0.0
        %1483 = vmatprep.subr.mxu0 0.0
        %1484 = vmatpush1.msra.mxu0 0.0
        %1485 = vmatprep.subr.mxu0 0.0
        %1486 = vmatpush1.msra.mxu0 0.0
        %1487 = vmatprep.subr.mxu0 0.0
        %1488 = vmatpush1.msra.mxu0 0.0
        %1489 = vmatprep.subr.mxu0 0.0
        %1490 = vmatpush1.msra.mxu0 0.0
        %1491 = vmatprep.subr.mxu0 0.0
        %1492 = vmatpush1.msra.mxu0 0.0
        %1493 = vmatprep.subr.mxu0 0.0
        %1494 = vmatpush1.msra.mxu0 0.0
        %1495 = vmatprep.subr.mxu0 0.0
        %1496 = vmatpush1.msra.mxu0 0.0
        %1497 = vmatprep.subr.mxu0 0.0
        %1498 = vmatpush1.msra.mxu0 0.0
        %1499 = vmatprep.subr.mxu0 0.0
        %1500 = vmatpush1.msra.mxu0 0.0
        %1501 = vmatprep.subr.mxu0 0.0
        %1502 = vmatpush1.msra.mxu0 0.0
        %1503 = vmatprep.subr.mxu0 0.0
        %1504 = vmatpush1.msra.mxu0 0.0
        %1505 = vmatprep.subr.mxu0 0.0
        %1506 = vmatpush1.msra.mxu0 0.0
        %1507 = vmatprep.subr.mxu0 0.0
        %1508 = vmatpush1.msra.mxu0 0.0
        %1509 = vmatprep.subr.mxu0 0.0
        %1510 = vmatpush1.msra.mxu0 0.0
        %1511 = vmatprep.subr.mxu0 0.0
        %1512 = vmatpush1.msra.mxu0 0.0
        %1513 = vmatprep.subr.mxu0 0.0
        %1514 = vmatpush1.msra.mxu0 0.0
        %1515 = vmatprep.subr.mxu0 0.0
        %1516 = vmatpush1.msra.mxu0 0.0
        %1517 = vmatprep.subr.mxu0 0.0
        %1518 = vmatpush1.msra.mxu0 0.0
        %1519 = vmatprep.subr.mxu0 0.0
        %1520 = vmatpush1.msra.mxu0 0.0
        %1521 = vmatprep.subr.mxu0 0.0
        %1522 = vmatpush1.msra.mxu0 0.0
        %1523 = vmatprep.subr.mxu0 0.0
        %1524 = vmatpush1.msra.mxu0 0.0
        %1525 = vmatprep.subr.mxu0 0.0
        %1526 = vmatpush1.msra.mxu0 0.0
        %1527 = vmatprep.subr.mxu0 0.0
        %1528 = vmatpush1.msra.mxu0 0.0
        %1529 = vmatprep.subr.mxu0 0.0
        %1530 = vmatpush1.msra.mxu0 0.0
        %1531 = vmatprep.subr.mxu0 0.0
        %1532 = vmatpush1.msra.mxu0 0.0
        %1533 = vmatprep.mubr.f32.mxu0 0.0
        %1534 = vmatmul.mubr.f32.gmra.mrb[0].mxu0 %v1464
        %v1535 = vpop.f32.mrb[0].mxu0
        %v1536 = vadd.f32 0.0, %v1535
        %v1537 = vpop.f32.mrb[0].mxu0
        %1538 = vmatprep.mubr.f32.mxu0 0.0
        %1539 = vmatmul.mubr.f32.gmra.mrb[0].mxu0 %v1467
        %v1540 = vpop.f32.mrb[0].mxu0
        %v1541 = vadd.f32 0.0, %v1540
        %v1542 = vpop.f32.mrb[0].mxu0
        %1543 = vdwg.mxu0
        %v1544 = vmul.f32 %v277, %v1536
        %v1545 = vmul.f32 %v278, %v1541
        %v1546 = vadd.f32 %v1377, %v1544
        %v1547 = vadd.f32 %v1382, %v1545
        %v1548 = vmul.f32 %v1546, 0.0034722222
        %v1549 = vmul.f32 %v1547, 0.0034722222
        %v1550 = vsub.f32 0.0, %v1548
        %v1551 = vsub.f32 0.0, %v1549
        %1552 = vst.msk [vmem:[%s261] sm:$0xff] %vm367, %v1550
        %1553 = vst.msk [vmem:[%s261 + $0x8] sm:$0xff] %vm367, %v1551
        %s1554 = sand.u32 %s164, 1
        %s1555 = scalar_lea.sflag [#allocation3], %s1554
        %s1556 = sand.u32 %s164, 1
        %s1557 = smul.addr %s1556, 16
        %s1558 = scalar_lea.vmem [#allocation2], %s1557
        // Predicated region
        $region45: #{tpu_custom_call.1} parent=43 // pred_check
          %p1559 = pneg %p174
        $region46: #{tpu_custom_call.1} parent=43 // pred_check_branch
          %1561 = sbr.rel (%p1559) target = $region48
        $region47: #{tpu_custom_call.1} parent=43 // pred_region
          %s1562 = smul.u32 2, %s20
          %s1564 = ssub.s32 256, 256
          %1565 = vsyncadd %s1555, %s1564
          %s1566 = smul.addr %s1562, 128
          %s1567 = scalar_lea.hbm %s6, %s1566
          %s1568 = sshll.u32 %s1558, 4
          %s1569 = int_to_ptr.vmem [resolvable:$true] %s1568
          %1574 = dma.vmem_to_hbm [thread:$0]  %s1569, 256, %s1567, %s1555, 128, 128, 8
        $region48: #{tpu_custom_call.1} parent=43 // pred_fallthru
          _
      $region44: #{tpu_custom_call.1} parent=5 // pred_fallthru
        _
      %p1575 = scmp.le.s32.totalorder 2, %s15
      // Predicated region
      $region49: #{tpu_custom_call.1} parent=5 // pred_check
        %p1576 = pneg %p1575
      $region50: #{tpu_custom_call.1} parent=5 // pred_check_branch
        %1578 = sbr.rel (%p1576) target = $region52
      $region51: #{tpu_custom_call.1} parent=5 // pred_region
        %s1579 = ssub.s32 %s15, 2
        // Predicated region
        $region53: #{tpu_custom_call.1} parent=51 // pred_check
          %p1580 = pneg %p180
        $region54: #{tpu_custom_call.1} parent=51 // pred_check_branch
          %1582 = sbr.rel (%p1580) target = $region56
        $region55: #{tpu_custom_call.1} parent=51 // pred_region
          %s1583 = sand.u32 %s165, 1
          %s1584 = scalar_lea.sflag [#allocation3], %s1583
          %s1585 = sand.u32 %s165, 1
          %s1586 = smul.addr %s1585, 16
          %s1587 = scalar_lea.vmem [#allocation2], %s1586
          %1588 = dma.done %s1584, 256
        $region56: #{tpu_custom_call.1} parent=51 // pred_fallthru
          _
      $region52: #{tpu_custom_call.1} parent=5 // pred_fallthru
        _
    $region6: #{tpu_custom_call.1} parent=1 // loop_footer
      %s19 = sadd.s32 1, %s15
    $region7: #{tpu_custom_call.1} parent=1 // loop_footer_branch
      %14 = sbr.rel target = $region3
    $region8: #{tpu_custom_call.1} parent=1 // loop_exit
      _
    %1589 = vsyncpa [#allocation3], 1
    %s1590 = scalar_lea.sflag [#allocation3], 1
    %1591 = vsyncpa %s1590, 1

</llo_original>
